<compile_context>
chip_gen: v7x
topology: tpu7x:2x2x1
jax: 0.10.0
libtpu: 0.0.40
codegen_flags: <defaults>
</compile_context>

<pallas_src>
import functools

import jax
import jax.numpy as jnp
from jax import lax
from jax.experimental import pallas as pl
from jax.experimental.pallas import tpu as pltpu


def discriminator_kernel(track_ref,     # (Tc, N)   current track chunk
                         wnote_ref,     # (N, 3S)   [Wf_note | Wi_note | Wc]
                         bnote_ref,     # (1, 3S)   [bf | bi | bc]
                         wstate_ref,    # (S, 2S)   [Wf_state | Wi_state]
                         w1_ref, b1_ref,
                         w2_ref, b2_ref,
                         out_ref,       # (1, S)
                         state_ref,     # VMEM scratch (1, S), persists over grid
                         pre_ref):      # VMEM scratch (Tc, 3S)
    S = state_ref.shape[1]
    Tc = track_ref.shape[0]

    # ---- init recurrent state on the first chunk ------------------------------
    @pl.when(pl.program_id(0) == 0)
    def _():
        state_ref[...] = jnp.zeros_like(state_ref)

    # ---- dense note precompute for this chunk: one MXU matmul -----------------
    pre_ref[...] = (
        jnp.dot(track_ref[...], wnote_ref[...], preferred_element_type=jnp.float32)
        + bnote_ref[...]
    )

    # ---- serial recurrence over the chunk -------------------------------------
    def step(t, state):
        pre_t = pre_ref[pl.ds(t, 1), :]                     # (1, 3S)
        # fused state-side matmul for both gates (old state for f AND i)
        sg = jnp.dot(state, wstate_ref[...],
                     preferred_element_type=jnp.float32)     # (1, 2S)
        fi = jax.nn.sigmoid(pre_t[:, :2 * S] + sg)           # one EUP push for both gates
        f = fi[:, :S]
        i = fi[:, S:]
        c = jnp.tanh(pre_t[:, 2 * S:])
        # state = state * forget + input * candidate
        return state * f + i * c

    state_ref[...] = lax.fori_loop(0, Tc, step, state_ref[...], unroll=True)

    # ---- output head on the last chunk ----------------------------------------
    @pl.when(pl.program_id(0) == pl.num_programs(0) - 1)
    def _():
        state = state_ref[...]
        h = jnp.maximum(
            jnp.dot(state, w1_ref[...], preferred_element_type=jnp.float32)
            + b1_ref[...], 0.0)
        h = jnp.maximum(
            jnp.dot(h, w2_ref[...], preferred_element_type=jnp.float32)
            + b2_ref[...], 0.0)
        m = jnp.max(h, axis=-1, keepdims=True)
        e = jnp.exp(h - m)
        out_ref[...] = h - m - jnp.log(jnp.sum(e, axis=-1, keepdims=True))


def pack_params(params):
    """Fuse gate weights into the layouts the kernel consumes."""
    return {
        "wnote": jnp.concatenate([params["wfn"], params["win"], params["wc"]], axis=1),
        "bnote": jnp.concatenate([params["bf"], params["bi"], params["bc"]], axis=1),
        "wstate": jnp.concatenate([params["wfs"], params["wis"]], axis=1),
        "w1": params["w1"], "b1": params["b1"],
        "w2": params["w2"], "b2": params["b2"],
    }


@functools.partial(jax.jit, static_argnames=("t_chunk",))
def _run(track, packed, t_chunk):
    T, N = track.shape
    S = packed["b1"].shape[-1]
    grid = (T // t_chunk,)

    const = lambda t: (0, 0)  # weights / biases: same full block every grid step
    out = pl.pallas_call(
        discriminator_kernel,
        out_shape=jax.ShapeDtypeStruct((1, S), jnp.float32),
        grid=grid,
        in_specs=[
            pl.BlockSpec((t_chunk, N), lambda t: (t, 0)),       # streamed track
            pl.BlockSpec((N, 3 * S), const),
            pl.BlockSpec((1, 3 * S), const),
            pl.BlockSpec((S, 2 * S), const),
            pl.BlockSpec((S, S), const),
            pl.BlockSpec((1, S), const),
            pl.BlockSpec((S, S), const),
            pl.BlockSpec((1, S), const),
        ],
        out_specs=pl.BlockSpec((1, S), const),
        scratch_shapes=[
            pltpu.VMEM((1, S), jnp.float32),          # recurrent state (persists)
            pltpu.VMEM((t_chunk, 3 * S), jnp.float32) # note precompute buffer
        ],
        compiler_params=pltpu.CompilerParams(
            dimension_semantics=("arbitrary",),       # sequential recurrence axis
            vmem_limit_bytes=32 * 1024 * 1024,        # explicit budget (v7x-safe)
        ),
    )(track, packed["wnote"], packed["bnote"], packed["wstate"],
      packed["w1"], packed["b1"], packed["w2"], packed["b2"])
    return out[0]


def discriminator_v1_forward(track, params, t_chunk=None):
    """track: (T, note_size) f32 -> (state_size,) f32 log-probs."""
    T = track.shape[0]
    if t_chunk is None or T % t_chunk != 0:
        t_chunk = T  # whole track in a single chunk (fine for modest T)
    return _run(track, pack_params(params), int(t_chunk))


def _linear_init(key, fan_in, fan_out):
    """Mimic torch.nn.Linear default init: U(-1/sqrt(fan_in), 1/sqrt(fan_in))."""
    kw, kb = jax.random.split(key)
    bound = 1.0 / jnp.sqrt(jnp.float32(fan_in))
    w = jax.random.uniform(kw, (fan_out, fan_in), jnp.float32, -bound, bound)
    b = jax.random.uniform(kb, (1, fan_out), jnp.float32, -bound, bound)
    return w, b


def init_params(key, note_size, state_size):
    N, S = note_size, state_size
    kf, ki, kc, k1, k2 = jax.random.split(key, 5)
    # gate inputs are cat([note, state]) -> split weight into note/state blocks
    wf, bf = _linear_init(kf, N + S, S)
    wi, bi = _linear_init(ki, N + S, S)
    wc, bc = _linear_init(kc, N, S)
    w1, b1 = _linear_init(k1, S, S)
    w2, b2 = _linear_init(k2, S, S)
    return {
        "wfn": wf[:, :N].T, "wfs": wf[:, N:].T, "bf": bf,
        "win": wi[:, :N].T, "wis": wi[:, N:].T, "bi": bi,
        "wc": wc.T, "bc": bc,
        "w1": w1.T, "b1": b1,
        "w2": w2.T, "b2": b2,
    }


def reference_forward(track, params):
    """Pure-JAX reference matching the PyTorch forward() (unfused weights)."""
    S = params["b1"].shape[-1]
    state = jnp.zeros((1, S), jnp.float32)
    for t in range(track.shape[0]):
        note = track[t:t + 1]
        f = jax.nn.sigmoid(note @ params["wfn"] + state @ params["wfs"] + params["bf"])
        i = jax.nn.sigmoid(note @ params["win"] + state @ params["wis"] + params["bi"])
        c = jnp.tanh(note @ params["wc"] + params["bc"])
        state = state * f + i * c
    h = jax.nn.relu(state @ params["w1"] + params["b1"])
    h = jax.nn.relu(h @ params["w2"] + params["b2"])
    return jax.nn.log_softmax(h, axis=-1)[0]


if __name__ == "__main__":
    # small, lane-aligned shapes consistent with the module's ctor args
    note_size, state_size, seq = 128, 128, 16

    key = jax.random.PRNGKey(0)
    kp, kx = jax.random.split(key)
    params = init_params(kp, note_size, state_size)
    track = jax.random.normal(kx, (seq, note_size), jnp.float32)

    # t_chunk=8 -> grid of 2 time chunks, exercising the streamed recurrence
    out = discriminator_v1_forward(track, params, t_chunk=8)
    out = jax.block_until_ready(out)

    ref = reference_forward(track, params)
    assert out.shape == (state_size,)
    assert jnp.allclose(out, ref, atol=1e-5, rtol=1e-5), (out, ref)

    print("KERNEL_OK")
</pallas_src>

<mosaic_0001>
module attributes {stable_mosaic.version = 11 : i64} {
  func.func @discriminator_kernel(%arg0: i32, %arg1: memref<8x128xf32, #tpu.memory_space<vmem>>, %arg2: memref<128x384xf32, #tpu.memory_space<vmem>>, %arg3: memref<1x384xf32, #tpu.memory_space<vmem>>, %arg4: memref<128x256xf32, #tpu.memory_space<vmem>>, %arg5: memref<128x128xf32, #tpu.memory_space<vmem>>, %arg6: memref<1x128xf32, #tpu.memory_space<vmem>>, %arg7: memref<128x128xf32, #tpu.memory_space<vmem>>, %arg8: memref<1x128xf32, #tpu.memory_space<vmem>>, %arg9: memref<1x128xf32, #tpu.memory_space<vmem>>, %arg10: memref<1x128xf32, #tpu.memory_space<vmem>>, %arg11: memref<8x384xf32, #tpu.memory_space<vmem>>) attributes {dimension_semantics = [#tpu.dimension_semantics<arbitrary>], iteration_bounds = array<i64: 2>, scalar_prefetch = 0 : i64, scratch_operands = 2 : i64, tpu.core_type = #tpu.core_type<tc>, window_params = [{transform_indices = @transform_0, window_bounds = array<i64: 8, 128>}, {pipeline_mode = #tpu.pipeline_mode<synchronous>, transform_indices = @transform_1, window_bounds = array<i64: 128, 384>}, {pipeline_mode = #tpu.pipeline_mode<synchronous>, transform_indices = @transform_2, window_bounds = array<i64: 1, 384>}, {pipeline_mode = #tpu.pipeline_mode<synchronous>, transform_indices = @transform_3, window_bounds = array<i64: 128, 256>}, {pipeline_mode = #tpu.pipeline_mode<synchronous>, transform_indices = @transform_4, window_bounds = array<i64: 128, 128>}, {pipeline_mode = #tpu.pipeline_mode<synchronous>, transform_indices = @transform_5, window_bounds = array<i64: 1, 128>}, {pipeline_mode = #tpu.pipeline_mode<synchronous>, transform_indices = @transform_6, window_bounds = array<i64: 128, 128>}, {pipeline_mode = #tpu.pipeline_mode<synchronous>, transform_indices = @transform_7, window_bounds = array<i64: 1, 128>}, {pipeline_mode = #tpu.pipeline_mode<synchronous>, transform_indices = @transform_8, window_bounds = array<i64: 1, 128>}]} {
    %c0_i32 = arith.constant 0 : i32
    %0 = arith.cmpi eq, %arg0, %c0_i32 : i32
    %1 = arith.extui %0 : i1 to i32
    %c0_i32_0 = arith.constant 0 : i32
    %2 = arith.cmpi ne, %1, %c0_i32_0 : i32
    scf.if %2 {
      %cst_55 = arith.constant 0.000000e+00 : f32
      %159 = vector.broadcast %cst_55 : f32 to vector<1x128xf32>
      %c0_56 = arith.constant 0 : index
      %c0_57 = arith.constant 0 : index
      %160 = vector.load %arg10[%c0_56, %c0_57] : memref<1x128xf32, #tpu.memory_space<vmem>>, vector<1x128xf32>
      tpu.vector_store %arg10[%c0_56, %c0_57], %159 {strides = array<i32>} : memref<1x128xf32, #tpu.memory_space<vmem>>, vector<1x128xf32>,
    } else {
    }
    %c0 = arith.constant 0 : index
    %c0_1 = arith.constant 0 : index
    %3 = vector.load %arg1[%c0, %c0_1] : memref<8x128xf32, #tpu.memory_space<vmem>>, vector<8x128xf32>
    %c0_2 = arith.constant 0 : index
    %c0_3 = arith.constant 0 : index
    %4 = vector.load %arg2[%c0_2, %c0_3] : memref<128x384xf32, #tpu.memory_space<vmem>>, vector<128x384xf32>
    %cst = arith.constant dense<0.000000e+00> : vector<8x384xf32>
    %5 = tpu.matmul %3, %4, %cst {dimension_numbers = #tpu.dot_dimension_numbers<[1], [0], [0], [1], [0, 0, 1, 1], [], []>} : vector<8x128xf32>, vector<128x384xf32>, vector<8x384xf32> -> vector<8x384xf32>
    %c0_4 = arith.constant 0 : index
    %c0_5 = arith.constant 0 : index
    %6 = vector.load %arg3[%c0_4, %c0_5] : memref<1x384xf32, #tpu.memory_space<vmem>>, vector<1x384xf32>
    %7 = vector.broadcast %6 : vector<1x384xf32> to vector<8x384xf32>
    %8 = arith.addf %5, %7 : vector<8x384xf32>
    %c0_6 = arith.constant 0 : index
    %c0_7 = arith.constant 0 : index
    %9 = vector.load %arg11[%c0_6, %c0_7] : memref<8x384xf32, #tpu.memory_space<vmem>>, vector<8x384xf32>
    tpu.vector_store %arg11[%c0_6, %c0_7], %8 {strides = array<i32>} : memref<8x384xf32, #tpu.memory_space<vmem>>, vector<8x384xf32>,
    %c0_8 = arith.constant 0 : index
    %c0_9 = arith.constant 0 : index
    %10 = vector.load %arg10[%c0_8, %c0_9] : memref<1x128xf32, #tpu.memory_space<vmem>>, vector<1x128xf32>
    %c0_i32_10 = arith.constant 0 : i32
    %11 = arith.index_cast %c0_i32_10 : i32 to index
    %c0_11 = arith.constant 0 : index
    %12 = vector.load %arg11[%11, %c0_11] : memref<8x384xf32, #tpu.memory_space<vmem>>, vector<1x384xf32>
    %c0_12 = arith.constant 0 : index
    %c0_13 = arith.constant 0 : index
    %13 = vector.load %arg4[%c0_12, %c0_13] : memref<128x256xf32, #tpu.memory_space<vmem>>, vector<128x256xf32>
    %cst_14 = arith.constant dense<0.000000e+00> : vector<1x256xf32>
    %14 = tpu.matmul %10, %13, %cst_14 {dimension_numbers = #tpu.dot_dimension_numbers<[1], [0], [0], [1], [0, 0, 1, 1], [], []>} : vector<1x128xf32>, vector<128x256xf32>, vector<1x256xf32> -> vector<1x256xf32>
    %15 = vector.extract_strided_slice %12 {offsets = [0, 0], sizes = [1, 256], strides = [1, 1]} : vector<1x384xf32> to vector<1x256xf32>
    %16 = arith.addf %15, %14 : vector<1x256xf32>
    %17 = arith.negf %16 : vector<1x256xf32>
    %18 = math.exp %17 : vector<1x256xf32>
    %cst_15 = arith.constant 1.000000e+00 : f32
    %19 = vector.broadcast %cst_15 : f32 to vector<1x256xf32>
    %20 = arith.addf %19, %18 : vector<1x256xf32>
    %21 = arith.divf %19, %20 : vector<1x256xf32>
    %22 = vector.extract_strided_slice %21 {offsets = [0, 0], sizes = [1, 128], strides = [1, 1]} : vector<1x256xf32> to vector<1x128xf32>
    %23 = vector.extract_strided_slice %21 {offsets = [0, 128], sizes = [1, 128], strides = [1, 1]} : vector<1x256xf32> to vector<1x128xf32>
    %24 = vector.extract_strided_slice %12 {offsets = [0, 256], sizes = [1, 128], strides = [1, 1]} : vector<1x384xf32> to vector<1x128xf32>
    %25 = math.tanh %24 : vector<1x128xf32>
    %26 = arith.mulf %10, %22 : vector<1x128xf32>
    %27 = arith.mulf %23, %25 : vector<1x128xf32>
    %28 = arith.addf %26, %27 : vector<1x128xf32>
    %c1_i32 = arith.constant 1 : i32
    %29 = arith.index_cast %c1_i32 : i32 to index
    %c0_16 = arith.constant 0 : index
    %30 = vector.load %arg11[%29, %c0_16] : memref<8x384xf32, #tpu.memory_space<vmem>>, vector<1x384xf32>
    %c0_17 = arith.constant 0 : index
    %c0_18 = arith.constant 0 : index
    %31 = vector.load %arg4[%c0_17, %c0_18] : memref<128x256xf32, #tpu.memory_space<vmem>>, vector<128x256xf32>
    %cst_19 = arith.constant dense<0.000000e+00> : vector<1x256xf32>
    %32 = tpu.matmul %28, %31, %cst_19 {dimension_numbers = #tpu.dot_dimension_numbers<[1], [0], [0], [1], [0, 0, 1, 1], [], []>} : vector<1x128xf32>, vector<128x256xf32>, vector<1x256xf32> -> vector<1x256xf32>
    %33 = vector.extract_strided_slice %30 {offsets = [0, 0], sizes = [1, 256], strides = [1, 1]} : vector<1x384xf32> to vector<1x256xf32>
    %34 = arith.addf %33, %32 : vector<1x256xf32>
    %35 = arith.negf %34 : vector<1x256xf32>
    %36 = math.exp %35 : vector<1x256xf32>
    %cst_20 = arith.constant 1.000000e+00 : f32
    %37 = vector.broadcast %cst_20 : f32 to vector<1x256xf32>
    %38 = arith.addf %37, %36 : vector<1x256xf32>
    %39 = arith.divf %37, %38 : vector<1x256xf32>
    %40 = vector.extract_strided_slice %39 {offsets = [0, 0], sizes = [1, 128], strides = [1, 1]} : vector<1x256xf32> to vector<1x128xf32>
    %41 = vector.extract_strided_slice %39 {offsets = [0, 128], sizes = [1, 128], strides = [1, 1]} : vector<1x256xf32> to vector<1x128xf32>
    %42 = vector.extract_strided_slice %30 {offsets = [0, 256], sizes = [1, 128], strides = [1, 1]} : vector<1x384xf32> to vector<1x128xf32>
    %43 = math.tanh %42 : vector<1x128xf32>
    %44 = arith.mulf %28, %40 : vector<1x128xf32>
    %45 = arith.mulf %41, %43 : vector<1x128xf32>
    %46 = arith.addf %44, %45 : vector<1x128xf32>
    %c2_i32 = arith.constant 2 : i32
    %47 = arith.index_cast %c2_i32 : i32 to index
    %c0_21 = arith.constant 0 : index
    %48 = vector.load %arg11[%47, %c0_21] : memref<8x384xf32, #tpu.memory_space<vmem>>, vector<1x384xf32>
    %c0_22 = arith.constant 0 : index
    %c0_23 = arith.constant 0 : index
    %49 = vector.load %arg4[%c0_22, %c0_23] : memref<128x256xf32, #tpu.memory_space<vmem>>, vector<128x256xf32>
    %cst_24 = arith.constant dense<0.000000e+00> : vector<1x256xf32>
    %50 = tpu.matmul %46, %49, %cst_24 {dimension_numbers = #tpu.dot_dimension_numbers<[1], [0], [0], [1], [0, 0, 1, 1], [], []>} : vector<1x128xf32>, vector<128x256xf32>, vector<1x256xf32> -> vector<1x256xf32>
    %51 = vector.extract_strided_slice %48 {offsets = [0, 0], sizes = [1, 256], strides = [1, 1]} : vector<1x384xf32> to vector<1x256xf32>
    %52 = arith.addf %51, %50 : vector<1x256xf32>
    %53 = arith.negf %52 : vector<1x256xf32>
    %54 = math.exp %53 : vector<1x256xf32>
    %cst_25 = arith.constant 1.000000e+00 : f32
    %55 = vector.broadcast %cst_25 : f32 to vector<1x256xf32>
    %56 = arith.addf %55, %54 : vector<1x256xf32>
    %57 = arith.divf %55, %56 : vector<1x256xf32>
    %58 = vector.extract_strided_slice %57 {offsets = [0, 0], sizes = [1, 128], strides = [1, 1]} : vector<1x256xf32> to vector<1x128xf32>
    %59 = vector.extract_strided_slice %57 {offsets = [0, 128], sizes = [1, 128], strides = [1, 1]} : vector<1x256xf32> to vector<1x128xf32>
    %60 = vector.extract_strided_slice %48 {offsets = [0, 256], sizes = [1, 128], strides = [1, 1]} : vector<1x384xf32> to vector<1x128xf32>
    %61 = math.tanh %60 : vector<1x128xf32>
    %62 = arith.mulf %46, %58 : vector<1x128xf32>
    %63 = arith.mulf %59, %61 : vector<1x128xf32>
    %64 = arith.addf %62, %63 : vector<1x128xf32>
    %c3_i32 = arith.constant 3 : i32
    %65 = arith.index_cast %c3_i32 : i32 to index
    %c0_26 = arith.constant 0 : index
    %66 = vector.load %arg11[%65, %c0_26] : memref<8x384xf32, #tpu.memory_space<vmem>>, vector<1x384xf32>
    %c0_27 = arith.constant 0 : index
    %c0_28 = arith.constant 0 : index
    %67 = vector.load %arg4[%c0_27, %c0_28] : memref<128x256xf32, #tpu.memory_space<vmem>>, vector<128x256xf32>
    %cst_29 = arith.constant dense<0.000000e+00> : vector<1x256xf32>
    %68 = tpu.matmul %64, %67, %cst_29 {dimension_numbers = #tpu.dot_dimension_numbers<[1], [0], [0], [1], [0, 0, 1, 1], [], []>} : vector<1x128xf32>, vector<128x256xf32>, vector<1x256xf32> -> vector<1x256xf32>
    %69 = vector.extract_strided_slice %66 {offsets = [0, 0], sizes = [1, 256], strides = [1, 1]} : vector<1x384xf32> to vector<1x256xf32>
    %70 = arith.addf %69, %68 : vector<1x256xf32>
    %71 = arith.negf %70 : vector<1x256xf32>
    %72 = math.exp %71 : vector<1x256xf32>
    %cst_30 = arith.constant 1.000000e+00 : f32
    %73 = vector.broadcast %cst_30 : f32 to vector<1x256xf32>
    %74 = arith.addf %73, %72 : vector<1x256xf32>
    %75 = arith.divf %73, %74 : vector<1x256xf32>
    %76 = vector.extract_strided_slice %75 {offsets = [0, 0], sizes = [1, 128], strides = [1, 1]} : vector<1x256xf32> to vector<1x128xf32>
    %77 = vector.extract_strided_slice %75 {offsets = [0, 128], sizes = [1, 128], strides = [1, 1]} : vector<1x256xf32> to vector<1x128xf32>
    %78 = vector.extract_strided_slice %66 {offsets = [0, 256], sizes = [1, 128], strides = [1, 1]} : vector<1x384xf32> to vector<1x128xf32>
    %79 = math.tanh %78 : vector<1x128xf32>
    %80 = arith.mulf %64, %76 : vector<1x128xf32>
    %81 = arith.mulf %77, %79 : vector<1x128xf32>
    %82 = arith.addf %80, %81 : vector<1x128xf32>
    %c4_i32 = arith.constant 4 : i32
    %83 = arith.index_cast %c4_i32 : i32 to index
    %c0_31 = arith.constant 0 : index
    %84 = vector.load %arg11[%83, %c0_31] : memref<8x384xf32, #tpu.memory_space<vmem>>, vector<1x384xf32>
    %c0_32 = arith.constant 0 : index
    %c0_33 = arith.constant 0 : index
    %85 = vector.load %arg4[%c0_32, %c0_33] : memref<128x256xf32, #tpu.memory_space<vmem>>, vector<128x256xf32>
    %cst_34 = arith.constant dense<0.000000e+00> : vector<1x256xf32>
    %86 = tpu.matmul %82, %85, %cst_34 {dimension_numbers = #tpu.dot_dimension_numbers<[1], [0], [0], [1], [0, 0, 1, 1], [], []>} : vector<1x128xf32>, vector<128x256xf32>, vector<1x256xf32> -> vector<1x256xf32>
    %87 = vector.extract_strided_slice %84 {offsets = [0, 0], sizes = [1, 256], strides = [1, 1]} : vector<1x384xf32> to vector<1x256xf32>
    %88 = arith.addf %87, %86 : vector<1x256xf32>
    %89 = arith.negf %88 : vector<1x256xf32>
    %90 = math.exp %89 : vector<1x256xf32>
    %cst_35 = arith.constant 1.000000e+00 : f32
    %91 = vector.broadcast %cst_35 : f32 to vector<1x256xf32>
    %92 = arith.addf %91, %90 : vector<1x256xf32>
    %93 = arith.divf %91, %92 : vector<1x256xf32>
    %94 = vector.extract_strided_slice %93 {offsets = [0, 0], sizes = [1, 128], strides = [1, 1]} : vector<1x256xf32> to vector<1x128xf32>
    %95 = vector.extract_strided_slice %93 {offsets = [0, 128], sizes = [1, 128], strides = [1, 1]} : vector<1x256xf32> to vector<1x128xf32>
    %96 = vector.extract_strided_slice %84 {offsets = [0, 256], sizes = [1, 128], strides = [1, 1]} : vector<1x384xf32> to vector<1x128xf32>
    %97 = math.tanh %96 : vector<1x128xf32>
    %98 = arith.mulf %82, %94 : vector<1x128xf32>
    %99 = arith.mulf %95, %97 : vector<1x128xf32>
    %100 = arith.addf %98, %99 : vector<1x128xf32>
    %c5_i32 = arith.constant 5 : i32
    %101 = arith.index_cast %c5_i32 : i32 to index
    %c0_36 = arith.constant 0 : index
    %102 = vector.load %arg11[%101, %c0_36] : memref<8x384xf32, #tpu.memory_space<vmem>>, vector<1x384xf32>
    %c0_37 = arith.constant 0 : index
    %c0_38 = arith.constant 0 : index
    %103 = vector.load %arg4[%c0_37, %c0_38] : memref<128x256xf32, #tpu.memory_space<vmem>>, vector<128x256xf32>
    %cst_39 = arith.constant dense<0.000000e+00> : vector<1x256xf32>
    %104 = tpu.matmul %100, %103, %cst_39 {dimension_numbers = #tpu.dot_dimension_numbers<[1], [0], [0], [1], [0, 0, 1, 1], [], []>} : vector<1x128xf32>, vector<128x256xf32>, vector<1x256xf32> -> vector<1x256xf32>
    %105 = vector.extract_strided_slice %102 {offsets = [0, 0], sizes = [1, 256], strides = [1, 1]} : vector<1x384xf32> to vector<1x256xf32>
    %106 = arith.addf %105, %104 : vector<1x256xf32>
    %107 = arith.negf %106 : vector<1x256xf32>
    %108 = math.exp %107 : vector<1x256xf32>
    %cst_40 = arith.constant 1.000000e+00 : f32
    %109 = vector.broadcast %cst_40 : f32 to vector<1x256xf32>
    %110 = arith.addf %109, %108 : vector<1x256xf32>
    %111 = arith.divf %109, %110 : vector<1x256xf32>
    %112 = vector.extract_strided_slice %111 {offsets = [0, 0], sizes = [1, 128], strides = [1, 1]} : vector<1x256xf32> to vector<1x128xf32>
    %113 = vector.extract_strided_slice %111 {offsets = [0, 128], sizes = [1, 128], strides = [1, 1]} : vector<1x256xf32> to vector<1x128xf32>
    %114 = vector.extract_strided_slice %102 {offsets = [0, 256], sizes = [1, 128], strides = [1, 1]} : vector<1x384xf32> to vector<1x128xf32>
    %115 = math.tanh %114 : vector<1x128xf32>
    %116 = arith.mulf %100, %112 : vector<1x128xf32>
    %117 = arith.mulf %113, %115 : vector<1x128xf32>
    %118 = arith.addf %116, %117 : vector<1x128xf32>
    %c6_i32 = arith.constant 6 : i32
    %119 = arith.index_cast %c6_i32 : i32 to index
    %c0_41 = arith.constant 0 : index
    %120 = vector.load %arg11[%119, %c0_41] : memref<8x384xf32, #tpu.memory_space<vmem>>, vector<1x384xf32>
    %c0_42 = arith.constant 0 : index
    %c0_43 = arith.constant 0 : index
    %121 = vector.load %arg4[%c0_42, %c0_43] : memref<128x256xf32, #tpu.memory_space<vmem>>, vector<128x256xf32>
    %cst_44 = arith.constant dense<0.000000e+00> : vector<1x256xf32>
    %122 = tpu.matmul %118, %121, %cst_44 {dimension_numbers = #tpu.dot_dimension_numbers<[1], [0], [0], [1], [0, 0, 1, 1], [], []>} : vector<1x128xf32>, vector<128x256xf32>, vector<1x256xf32> -> vector<1x256xf32>
    %123 = vector.extract_strided_slice %120 {offsets = [0, 0], sizes = [1, 256], strides = [1, 1]} : vector<1x384xf32> to vector<1x256xf32>
    %124 = arith.addf %123, %122 : vector<1x256xf32>
    %125 = arith.negf %124 : vector<1x256xf32>
    %126 = math.exp %125 : vector<1x256xf32>
    %cst_45 = arith.constant 1.000000e+00 : f32
    %127 = vector.broadcast %cst_45 : f32 to vector<1x256xf32>
    %128 = arith.addf %127, %126 : vector<1x256xf32>
    %129 = arith.divf %127, %128 : vector<1x256xf32>
    %130 = vector.extract_strided_slice %129 {offsets = [0, 0], sizes = [1, 128], strides = [1, 1]} : vector<1x256xf32> to vector<1x128xf32>
    %131 = vector.extract_strided_slice %129 {offsets = [0, 128], sizes = [1, 128], strides = [1, 1]} : vector<1x256xf32> to vector<1x128xf32>
    %132 = vector.extract_strided_slice %120 {offsets = [0, 256], sizes = [1, 128], strides = [1, 1]} : vector<1x384xf32> to vector<1x128xf32>
    %133 = math.tanh %132 : vector<1x128xf32>
    %134 = arith.mulf %118, %130 : vector<1x128xf32>
    %135 = arith.mulf %131, %133 : vector<1x128xf32>
    %136 = arith.addf %134, %135 : vector<1x128xf32>
    %c7_i32 = arith.constant 7 : i32
    %137 = arith.index_cast %c7_i32 : i32 to index
    %c0_46 = arith.constant 0 : index
    %138 = vector.load %arg11[%137, %c0_46] : memref<8x384xf32, #tpu.memory_space<vmem>>, vector<1x384xf32>
    %c0_47 = arith.constant 0 : index
    %c0_48 = arith.constant 0 : index
    %139 = vector.load %arg4[%c0_47, %c0_48] : memref<128x256xf32, #tpu.memory_space<vmem>>, vector<128x256xf32>
    %cst_49 = arith.constant dense<0.000000e+00> : vector<1x256xf32>
    %140 = tpu.matmul %136, %139, %cst_49 {dimension_numbers = #tpu.dot_dimension_numbers<[1], [0], [0], [1], [0, 0, 1, 1], [], []>} : vector<1x128xf32>, vector<128x256xf32>, vector<1x256xf32> -> vector<1x256xf32>
    %141 = vector.extract_strided_slice %138 {offsets = [0, 0], sizes = [1, 256], strides = [1, 1]} : vector<1x384xf32> to vector<1x256xf32>
    %142 = arith.addf %141, %140 : vector<1x256xf32>
    %143 = arith.negf %142 : vector<1x256xf32>
    %144 = math.exp %143 : vector<1x256xf32>
    %cst_50 = arith.constant 1.000000e+00 : f32
    %145 = vector.broadcast %cst_50 : f32 to vector<1x256xf32>
    %146 = arith.addf %145, %144 : vector<1x256xf32>
    %147 = arith.divf %145, %146 : vector<1x256xf32>
    %148 = vector.extract_strided_slice %147 {offsets = [0, 0], sizes = [1, 128], strides = [1, 1]} : vector<1x256xf32> to vector<1x128xf32>
    %149 = vector.extract_strided_slice %147 {offsets = [0, 128], sizes = [1, 128], strides = [1, 1]} : vector<1x256xf32> to vector<1x128xf32>
    %150 = vector.extract_strided_slice %138 {offsets = [0, 256], sizes = [1, 128], strides = [1, 1]} : vector<1x384xf32> to vector<1x128xf32>
    %151 = math.tanh %150 : vector<1x128xf32>
    %152 = arith.mulf %136, %148 : vector<1x128xf32>
    %153 = arith.mulf %149, %151 : vector<1x128xf32>
    %154 = arith.addf %152, %153 : vector<1x128xf32>
    %c8_i32 = arith.constant 8 : i32
    %c0_51 = arith.constant 0 : index
    %c0_52 = arith.constant 0 : index
    %155 = vector.load %arg10[%c0_51, %c0_52] : memref<1x128xf32, #tpu.memory_space<vmem>>, vector<1x128xf32>
    tpu.vector_store %arg10[%c0_51, %c0_52], %154 {strides = array<i32>} : memref<1x128xf32, #tpu.memory_space<vmem>>, vector<1x128xf32>,
    %c1_i32_53 = arith.constant 1 : i32
    %156 = arith.cmpi eq, %arg0, %c1_i32_53 : i32
    %157 = arith.extui %156 : i1 to i32
    %c0_i32_54 = arith.constant 0 : i32
    %158 = arith.cmpi ne, %157, %c0_i32_54 : i32
    scf.if %158 {
      %c0_55 = arith.constant 0 : index
      %c0_56 = arith.constant 0 : index
      %159 = vector.load %arg10[%c0_55, %c0_56] : memref<1x128xf32, #tpu.memory_space<vmem>>, vector<1x128xf32>
      %c0_57 = arith.constant 0 : index
      %c0_58 = arith.constant 0 : index
      %160 = vector.load %arg5[%c0_57, %c0_58] : memref<128x128xf32, #tpu.memory_space<vmem>>, vector<128x128xf32>
      %cst_59 = arith.constant dense<0.000000e+00> : vector<1x128xf32>
      %161 = tpu.matmul %159, %160, %cst_59 {dimension_numbers = #tpu.dot_dimension_numbers<[1], [0], [0], [1], [0, 0, 1, 1], [], []>} : vector<1x128xf32>, vector<128x128xf32>, vector<1x128xf32> -> vector<1x128xf32>
      %c0_60 = arith.constant 0 : index
      %c0_61 = arith.constant 0 : index
      %162 = vector.load %arg6[%c0_60, %c0_61] : memref<1x128xf32, #tpu.memory_space<vmem>>, vector<1x128xf32>
      %163 = arith.addf %161, %162 : vector<1x128xf32>
      %cst_62 = arith.constant 0.000000e+00 : f32
      %164 = vector.broadcast %cst_62 : f32 to vector<1x128xf32>
      %165 = arith.maximumf %163, %164 : vector<1x128xf32>
      %c0_63 = arith.constant 0 : index
      %c0_64 = arith.constant 0 : index
      %166 = vector.load %arg7[%c0_63, %c0_64] : memref<128x128xf32, #tpu.memory_space<vmem>>, vector<128x128xf32>
      %cst_65 = arith.constant dense<0.000000e+00> : vector<1x128xf32>
      %167 = tpu.matmul %165, %166, %cst_65 {dimension_numbers = #tpu.dot_dimension_numbers<[1], [0], [0], [1], [0, 0, 1, 1], [], []>} : vector<1x128xf32>, vector<128x128xf32>, vector<1x128xf32> -> vector<1x128xf32>
      %c0_66 = arith.constant 0 : index
      %c0_67 = arith.constant 0 : index
      %168 = vector.load %arg8[%c0_66, %c0_67] : memref<1x128xf32, #tpu.memory_space<vmem>>, vector<1x128xf32>
      %169 = arith.addf %167, %168 : vector<1x128xf32>
      %cst_68 = arith.constant 0.000000e+00 : f32
      %170 = vector.broadcast %cst_68 : f32 to vector<1x128xf32>
      %171 = arith.maximumf %169, %170 : vector<1x128xf32>
      %cst_69 = arith.constant dense<0xFF800000> : vector<1xf32>
      %172 = vector.multi_reduction <maximumf>, %171, %cst_69 [1] : vector<1x128xf32> to vector<1xf32>
      %173 = vector.shape_cast %172 : vector<1xf32> to vector<1x1xf32>
      %174 = vector.broadcast %173 : vector<1x1xf32> to vector<1x128xf32>
      %175 = arith.subf %171, %174 : vector<1x128xf32>
      %176 = math.exp %175 : vector<1x128xf32>
      %177 = vector.broadcast %173 : vector<1x1xf32> to vector<1x128xf32>
      %178 = arith.subf %171, %177 : vector<1x128xf32>
      %cst_70 = arith.constant dense<0.000000e+00> : vector<1xf32>
      %179 = vector.multi_reduction <add>, %176, %cst_70 [1] : vector<1x128xf32> to vector<1xf32>
      %180 = vector.shape_cast %179 : vector<1xf32> to vector<1x1xf32>
      %181 = math.log %180 : vector<1x1xf32>
      %182 = vector.broadcast %181 : vector<1x1xf32> to vector<1x128xf32>
      %183 = arith.subf %178, %182 : vector<1x128xf32>
      %c0_71 = arith.constant 0 : index
      %c0_72 = arith.constant 0 : index
      %184 = vector.load %arg9[%c0_71, %c0_72] : memref<1x128xf32, #tpu.memory_space<vmem>>, vector<1x128xf32>
      tpu.vector_store %arg9[%c0_71, %c0_72], %183 {strides = array<i32>} : memref<1x128xf32, #tpu.memory_space<vmem>>, vector<1x128xf32>,
    } else {
    }
    return
  }
  func.func @transform_0(%arg0: i32) -> (i32, i32) {
    %c0_i32 = arith.constant 0 : i32
    %c0_i32_0 = arith.constant 0 : i32
    return %arg0, %c0_i32 : i32, i32
  }
  func.func @transform_1(%arg0: i32) -> (i32, i32) {
    %c0_i32 = arith.constant 0 : i32
    %c0_i32_0 = arith.constant 0 : i32
    %c0_i32_1 = arith.constant 0 : i32
    return %c0_i32, %c0_i32_0 : i32, i32
  }
  func.func @transform_2(%arg0: i32) -> (i32, i32) {
    %c0_i32 = arith.constant 0 : i32
    %c0_i32_0 = arith.constant 0 : i32
    %c0_i32_1 = arith.constant 0 : i32
    return %c0_i32, %c0_i32_0 : i32, i32
  }
  func.func @transform_3(%arg0: i32) -> (i32, i32) {
    %c0_i32 = arith.constant 0 : i32
    %c0_i32_0 = arith.constant 0 : i32
    %c0_i32_1 = arith.constant 0 : i32
    return %c0_i32, %c0_i32_0 : i32, i32
  }
  func.func @transform_4(%arg0: i32) -> (i32, i32) {
    %c0_i32 = arith.constant 0 : i32
    %c0_i32_0 = arith.constant 0 : i32
    %c0_i32_1 = arith.constant 0 : i32
    return %c0_i32, %c0_i32_0 : i32, i32
  }
  func.func @transform_5(%arg0: i32) -> (i32, i32) {
    %c0_i32 = arith.constant 0 : i32
    %c0_i32_0 = arith.constant 0 : i32
    %c0_i32_1 = arith.constant 0 : i32
    return %c0_i32, %c0_i32_0 : i32, i32
  }
  func.func @transform_6(%arg0: i32) -> (i32, i32) {
    %c0_i32 = arith.constant 0 : i32
    %c0_i32_0 = arith.constant 0 : i32
    %c0_i32_1 = arith.constant 0 : i32
    return %c0_i32, %c0_i32_0 : i32, i32
  }
  func.func @transform_7(%arg0: i32) -> (i32, i32) {
    %c0_i32 = arith.constant 0 : i32
    %c0_i32_0 = arith.constant 0 : i32
    %c0_i32_1 = arith.constant 0 : i32
    return %c0_i32, %c0_i32_0 : i32, i32
  }
  func.func @transform_8(%arg0: i32) -> (i32, i32) {
    %c0_i32 = arith.constant 0 : i32
    %c0_i32_0 = arith.constant 0 : i32
    %c0_i32_1 = arith.constant 0 : i32
    return %c0_i32, %c0_i32_0 : i32, i32
  }
}

</mosaic_0001>

<llo_original>
// kernel: _run.1
$region0: #{_run.1}
  #allocation0 [shape = 'u32[]', space=smem, size = 0x4, offset = 0x4, fixed_abs, tag = 'smem constant byte address 0x4 - core index']
  #allocation1 [shape = 'u32[144,128]{1,0:T(1,128)}', space=vmem, size = 0x12000, scoped, tag = 'internal scratch']
  #allocation2 [shape = 'f32[1,128]{1,0:T(1,128)}', space=vmem, size = 0x200, scoped, tag = 'scratch operand']
  #allocation3 [shape = 'f32[8,384]{1,0:T(8,128)}', space=vmem, size = 0x3000, scoped, tag = 'scratch operand']
  %s0 = inlined_call_operand.hbm [shape: f32[16,128], index: 0, kind: input, shape index: {}]
  %s1 = inlined_call_operand.hbm [shape: f32[128,384], index: 1, kind: input, shape index: {}]
  %s2 = inlined_call_operand.vmem [shape: f32[1,384], index: 2, kind: input, shape index: {}]
  %s3 = inlined_call_operand.hbm [shape: f32[128,256], index: 3, kind: input, shape index: {}]
  %s4 = inlined_call_operand.hbm [shape: f32[128,128], index: 4, kind: input, shape index: {}]
  %s5 = inlined_call_operand.vmem [shape: f32[1,128], index: 5, kind: input, shape index: {}]
  %s6 = inlined_call_operand.hbm [shape: f32[128,128], index: 6, kind: input, shape index: {}]
  %s7 = inlined_call_operand.vmem [shape: f32[1,128], index: 7, kind: input, shape index: {}]
  %s8 = inlined_call_operand.hbm [shape: f32[1,128], index: 8, kind: output, shape index: {}]
  %s9 = sld [smem:[#allocation0]]
  $region93: #{_run.1} parent=0
    _
  %s11 = ssub.s32 1, %s9
  %s12 = scalar_select 0, %s11, %s9
  $region1: #{_run.1} parent=0
    #allocation4 [shape = 'u8[8192]{0}', space=vmem, size = 0x2000, scoped, tag = 'input window, operand 0']
    #allocation5 [shape = 's32[2]{0}', space=sflag, size = 0x8, scoped, tag = 'scoped memory for _run.1']
    #allocation6 [shape = 's32[2]{0}', space=sflag, size = 0x8, scoped, tag = 'scoped memory for _run.1']
    #allocation7 [shape = 'u8[196608]{0}', space=vmem, size = 0x30000, scoped, tag = 'input window, operand 1, single buffered']
    #allocation8 [shape = 's32[1]{0}', space=sflag, size = 0x4, scoped, tag = 'scoped memory for _run.1']
    #allocation9 [shape = 'u8[131072]{0}', space=vmem, size = 0x20000, scoped, tag = 'input window, operand 3, single buffered']
    #allocation10 [shape = 'u8[65536]{0}', space=vmem, size = 0x10000, scoped, tag = 'input window, operand 4, single buffered']
    #allocation11 [shape = 's32[1]{0}', space=sflag, size = 0x4, scoped, tag = 'scoped memory for _run.1']
    #allocation12 [shape = 'u8[65536]{0}', space=vmem, size = 0x10000, scoped, tag = 'input window, operand 6, single buffered']
    #allocation13 [shape = 'u8[512]{0}', space=vmem, size = 0x400, scoped, tag = 'output window, operand 0, single buffered']
    %13 = vsyncpa [#allocation5], 0
    %s14 = scalar_lea.sflag [#allocation5], 1
    %15 = vsyncpa %s14, 0
    %16 = vsyncpa [#allocation8], 0
    %17 = vsyncpa [#allocation11], 0
    %18 = vsyncpa [#allocation6], 0
    loop: start=0, step=1, limit=4
    $region2: #{_run.1} parent=1 // loop_pre_header
      _
    $region3: #{_run.1} parent=1 // loop_header
      %s20 = sphi 0, %s24
      %p21 = scmp.ge.s32.totalorder %s20, 4
      %s30 = sphi 0, %s32
      %s33 = sphi 0, %s30
      %s34 = sphi 0, %s33
      %s50 = sphi 0, %s34
      %s54 = sphi 0, %s54
      %s56 = sphi 0, %s54
      %s57 = sphi 0, %s56
      %s71 = sphi 0, %s57
      %s75 = sphi 0, %s75
      %s77 = sphi 0, %s75
      %s78 = sphi 0, %s77
      %s92 = sphi 0, %s78
      %s96 = sphi 0, %s96
      %s98 = sphi 0, %s96
      %s99 = sphi 0, %s98
      %s113 = sphi 0, %s99
      %s117 = sphi 0, %s117
      %s119 = sphi 0, %s117
      %s120 = sphi 0, %s119
      %s134 = sphi 0, %s120
      %s138 = sphi 0, %s138
      %s140 = sphi 0, %s138
      %s141 = sphi 0, %s140
      %s155 = sphi 0, %s141
      %s159 = sphi 0, %s159
      %s161 = sphi 0, %s159
      %s162 = sphi 0, %s161
      %s176 = sphi 0, %s162
      %s180 = sphi 0, %s180
      %s182 = sphi 0, %s180
      %s183 = sphi 0, %s182
      %s197 = sphi 0, %s183
      %s201 = sphi 0, %s201
      %s203 = sphi 0, %s201
      %s204 = sphi 0, %s203
      %s218 = sphi 0, %s204
    $region4: #{_run.1} parent=1 // loop_header_branch
      %23 = sbr.rel (%p21) target = $region8
    $region5: #{_run.1} parent=1 // loop_body
      %s25 = ssub.s32 %s20, 1
      %s26 = ssub.s32 %s20, 2
      %s27 = sadd.s32 %s20, 1
      %s28 = ssub.s32 %s20, %s27
      %p29 = scmp.eq.s32.totalorder %s28, 0
      %s31 = sadd.s32 %s30, 1
      %s32 = scalar_select %p29, %s30, %s31
      %p35 = pneg %p29
      %p36 = scmp.eq.s32.totalorder %s20, 1
      %p37 = por %p35, %p36
      %p38 = scmp.ne.s32.totalorder %s30, %s33
      %p39 = scmp.eq.s32.totalorder %s20, 0
      %p40 = por %p38, %p39
      %p41 = scmp.ne.s32.totalorder %s30, %s33
      %p42 = scmp.eq.s32.totalorder %s25, 1
      %p43 = por %p41, %p42
      %p44 = scmp.ne.s32.totalorder %s33, %s34
      %p45 = scmp.eq.s32.totalorder %s25, 0
      %p46 = por %p44, %p45
      %p47 = scmp.ne.s32.totalorder %s33, %s34
      %p48 = scmp.eq.s32.totalorder %s26, 1
      %p49 = por %p47, %p48
      %p51 = scmp.ne.s32.totalorder %s34, %s50
      %p52 = scmp.eq.s32.totalorder %s26, 0
      %p53 = por %p51, %p52
      %s55 = sadd.s32 %s54, 1
      %p58 = scmp.eq.s32.totalorder %s20, 1
      %p59 = scmp.ne.s32.totalorder %s54, %s56
      %p60 = scmp.eq.s32.totalorder %s20, 0
      %p61 = por %p59, %p60
      %p62 = scmp.ne.s32.totalorder %s54, %s56
      %p63 = scmp.eq.s32.totalorder %s25, 1
      %p64 = por %p62, %p63
      %p65 = scmp.ne.s32.totalorder %s56, %s57
      %p66 = scmp.eq.s32.totalorder %s25, 0
      %p67 = por %p65, %p66
      %p68 = scmp.ne.s32.totalorder %s56, %s57
      %p69 = scmp.eq.s32.totalorder %s26, 1
      %p70 = por %p68, %p69
      %p72 = scmp.ne.s32.totalorder %s57, %s71
      %p73 = scmp.eq.s32.totalorder %s26, 0
      %p74 = por %p72, %p73
      %s76 = sadd.s32 %s75, 1
      %p79 = scmp.eq.s32.totalorder %s20, 1
      %p80 = scmp.ne.s32.totalorder %s75, %s77
      %p81 = scmp.eq.s32.totalorder %s20, 0
      %p82 = por %p80, %p81
      %p83 = scmp.ne.s32.totalorder %s75, %s77
      %p84 = scmp.eq.s32.totalorder %s25, 1
      %p85 = por %p83, %p84
      %p86 = scmp.ne.s32.totalorder %s77, %s78
      %p87 = scmp.eq.s32.totalorder %s25, 0
      %p88 = por %p86, %p87
      %p89 = scmp.ne.s32.totalorder %s77, %s78
      %p90 = scmp.eq.s32.totalorder %s26, 1
      %p91 = por %p89, %p90
      %p93 = scmp.ne.s32.totalorder %s78, %s92
      %p94 = scmp.eq.s32.totalorder %s26, 0
      %p95 = por %p93, %p94
      %s97 = sadd.s32 %s96, 1
      %p100 = scmp.eq.s32.totalorder %s20, 1
      %p101 = scmp.ne.s32.totalorder %s96, %s98
      %p102 = scmp.eq.s32.totalorder %s20, 0
      %p103 = por %p101, %p102
      %p104 = scmp.ne.s32.totalorder %s96, %s98
      %p105 = scmp.eq.s32.totalorder %s25, 1
      %p106 = por %p104, %p105
      %p107 = scmp.ne.s32.totalorder %s98, %s99
      %p108 = scmp.eq.s32.totalorder %s25, 0
      %p109 = por %p107, %p108
      %p110 = scmp.ne.s32.totalorder %s98, %s99
      %p111 = scmp.eq.s32.totalorder %s26, 1
      %p112 = por %p110, %p111
      %p114 = scmp.ne.s32.totalorder %s99, %s113
      %p115 = scmp.eq.s32.totalorder %s26, 0
      %p116 = por %p114, %p115
      %s118 = sadd.s32 %s117, 1
      %p121 = scmp.eq.s32.totalorder %s20, 1
      %p122 = scmp.ne.s32.totalorder %s117, %s119
      %p123 = scmp.eq.s32.totalorder %s20, 0
      %p124 = por %p122, %p123
      %p125 = scmp.ne.s32.totalorder %s117, %s119
      %p126 = scmp.eq.s32.totalorder %s25, 1
      %p127 = por %p125, %p126
      %p128 = scmp.ne.s32.totalorder %s119, %s120
      %p129 = scmp.eq.s32.totalorder %s25, 0
      %p130 = por %p128, %p129
      %p131 = scmp.ne.s32.totalorder %s119, %s120
      %p132 = scmp.eq.s32.totalorder %s26, 1
      %p133 = por %p131, %p132
      %p135 = scmp.ne.s32.totalorder %s120, %s134
      %p136 = scmp.eq.s32.totalorder %s26, 0
      %p137 = por %p135, %p136
      %s139 = sadd.s32 %s138, 1
      %p142 = scmp.eq.s32.totalorder %s20, 1
      %p143 = scmp.ne.s32.totalorder %s138, %s140
      %p144 = scmp.eq.s32.totalorder %s20, 0
      %p145 = por %p143, %p144
      %p146 = scmp.ne.s32.totalorder %s138, %s140
      %p147 = scmp.eq.s32.totalorder %s25, 1
      %p148 = por %p146, %p147
      %p149 = scmp.ne.s32.totalorder %s140, %s141
      %p150 = scmp.eq.s32.totalorder %s25, 0
      %p151 = por %p149, %p150
      %p152 = scmp.ne.s32.totalorder %s140, %s141
      %p153 = scmp.eq.s32.totalorder %s26, 1
      %p154 = por %p152, %p153
      %p156 = scmp.ne.s32.totalorder %s141, %s155
      %p157 = scmp.eq.s32.totalorder %s26, 0
      %p158 = por %p156, %p157
      %s160 = sadd.s32 %s159, 1
      %p163 = scmp.eq.s32.totalorder %s20, 1
      %p164 = scmp.ne.s32.totalorder %s159, %s161
      %p165 = scmp.eq.s32.totalorder %s20, 0
      %p166 = por %p164, %p165
      %p167 = scmp.ne.s32.totalorder %s159, %s161
      %p168 = scmp.eq.s32.totalorder %s25, 1
      %p169 = por %p167, %p168
      %p170 = scmp.ne.s32.totalorder %s161, %s162
      %p171 = scmp.eq.s32.totalorder %s25, 0
      %p172 = por %p170, %p171
      %p173 = scmp.ne.s32.totalorder %s161, %s162
      %p174 = scmp.eq.s32.totalorder %s26, 1
      %p175 = por %p173, %p174
      %p177 = scmp.ne.s32.totalorder %s162, %s176
      %p178 = scmp.eq.s32.totalorder %s26, 0
      %p179 = por %p177, %p178
      %s181 = sadd.s32 %s180, 1
      %p184 = scmp.eq.s32.totalorder %s20, 1
      %p185 = scmp.ne.s32.totalorder %s180, %s182
      %p186 = scmp.eq.s32.totalorder %s20, 0
      %p187 = por %p185, %p186
      %p188 = scmp.ne.s32.totalorder %s180, %s182
      %p189 = scmp.eq.s32.totalorder %s25, 1
      %p190 = por %p188, %p189
      %p191 = scmp.ne.s32.totalorder %s182, %s183
      %p192 = scmp.eq.s32.totalorder %s25, 0
      %p193 = por %p191, %p192
      %p194 = scmp.ne.s32.totalorder %s182, %s183
      %p195 = scmp.eq.s32.totalorder %s26, 1
      %p196 = por %p194, %p195
      %p198 = scmp.ne.s32.totalorder %s183, %s197
      %p199 = scmp.eq.s32.totalorder %s26, 0
      %p200 = por %p198, %p199
      %s202 = sadd.s32 %s201, 1
      %p205 = scmp.eq.s32.totalorder %s20, 1
      %p206 = scmp.ne.s32.totalorder %s201, %s203
      %p207 = scmp.eq.s32.totalorder %s20, 0
      %p208 = por %p206, %p207
      %p209 = scmp.ne.s32.totalorder %s201, %s203
      %p210 = scmp.eq.s32.totalorder %s25, 1
      %p211 = por %p209, %p210
      %p212 = scmp.ne.s32.totalorder %s203, %s204
      %p213 = scmp.eq.s32.totalorder %s25, 0
      %p214 = por %p212, %p213
      %p215 = scmp.ne.s32.totalorder %s203, %s204
      %p216 = scmp.eq.s32.totalorder %s26, 1
      %p217 = por %p215, %p216
      %p219 = scmp.ne.s32.totalorder %s204, %s218
      %p220 = scmp.eq.s32.totalorder %s26, 0
      %p221 = por %p219, %p220
      %p222 = scmp.le.s32.totalorder 1, %s20
      %p223 = scmp.lt.s32.totalorder %s20, 3
      %p224 = pnand %p222, %p223
      %p225 = pneg %p224
      // Predicated region
      $region9: #{_run.1} parent=5 // pred_check
        _
      $region10: #{_run.1} parent=5 // pred_check_branch
        %227 = sbr.rel (%p224) target = $region12
      $region11: #{_run.1} parent=5 // pred_region
        %s228 = ssub.s32 %s20, 1
        // Predicated region
        $region13: #{_run.1} parent=11 // pred_check
          %p229 = pneg %p67
        $region14: #{_run.1} parent=11 // pred_check_branch
          %231 = sbr.rel (%p229) target = $region16
        $region15: #{_run.1} parent=11 // pred_region
          %s233 = ssub.s32 6144, 6144
          %234 = vsyncadd [#allocation8], %s233
          %s235 = sshll.u32 [#allocation7], 4
          %s236 = int_to_ptr.vmem [resolvable:$true] %s235
          %241 = dma.hbm_to_vmem [thread:$0]  %s1, 6144, %s236, [#allocation8], 384, 384, 24
        $region16: #{_run.1} parent=11 // pred_fallthru
          _
        // Predicated region
        $region17: #{_run.1} parent=11 // pred_check
          %p242 = pneg %p88
        $region18: #{_run.1} parent=11 // pred_check_branch
          %244 = sbr.rel (%p242) target = $region20
        $region19: #{_run.1} parent=11 // pred_region
          _
        $region20: #{_run.1} parent=11 // pred_fallthru
          _
        // Predicated region
        $region21: #{_run.1} parent=11 // pred_check
          %p245 = pneg %p109
        $region22: #{_run.1} parent=11 // pred_check_branch
          %247 = sbr.rel (%p245) target = $region24
        $region23: #{_run.1} parent=11 // pred_region
          %s249 = ssub.s32 4096, 4096
          %250 = vsyncadd [#allocation8], %s249
          %s251 = sshll.u32 [#allocation9], 4
          %s252 = int_to_ptr.vmem [resolvable:$true] %s251
          %257 = dma.hbm_to_vmem [thread:$0]  %s3, 4096, %s252, [#allocation8], 256, 256, 16
        $region24: #{_run.1} parent=11 // pred_fallthru
          _
        // Predicated region
        $region25: #{_run.1} parent=11 // pred_check
          %p258 = pneg %p130
        $region26: #{_run.1} parent=11 // pred_check_branch
          %260 = sbr.rel (%p258) target = $region28
        $region27: #{_run.1} parent=11 // pred_region
          %s262 = ssub.s32 2048, 2048
          %263 = vsyncadd [#allocation11], %s262
          %s264 = sshll.u32 [#allocation10], 4
          %s265 = int_to_ptr.vmem [resolvable:$true] %s264
          %270 = dma.hbm_to_vmem [thread:$0]  %s4, 2048, %s265, [#allocation11], 128, 128, 8
        $region28: #{_run.1} parent=11 // pred_fallthru
          _
        // Predicated region
        $region29: #{_run.1} parent=11 // pred_check
          %p271 = pneg %p151
        $region30: #{_run.1} parent=11 // pred_check_branch
          %273 = sbr.rel (%p271) target = $region32
        $region31: #{_run.1} parent=11 // pred_region
          _
        $region32: #{_run.1} parent=11 // pred_fallthru
          _
        // Predicated region
        $region33: #{_run.1} parent=11 // pred_check
          %p274 = pneg %p172
        $region34: #{_run.1} parent=11 // pred_check_branch
          %276 = sbr.rel (%p274) target = $region36
        $region35: #{_run.1} parent=11 // pred_region
          %s278 = ssub.s32 2048, 2048
          %279 = vsyncadd [#allocation11], %s278
          %s280 = sshll.u32 [#allocation12], 4
          %s281 = int_to_ptr.vmem [resolvable:$true] %s280
          %286 = dma.hbm_to_vmem [thread:$0]  %s6, 2048, %s281, [#allocation11], 128, 128, 8
        $region36: #{_run.1} parent=11 // pred_fallthru
          _
        // Predicated region
        $region37: #{_run.1} parent=11 // pred_check
          %p287 = pneg %p193
        $region38: #{_run.1} parent=11 // pred_check_branch
          %289 = sbr.rel (%p287) target = $region40
        $region39: #{_run.1} parent=11 // pred_region
          _
        $region40: #{_run.1} parent=11 // pred_fallthru
          _
      $region12: #{_run.1} parent=5 // pred_fallthru
        _
      %p290 = scmp.lt.s32.totalorder %s20, 2
      // Predicated region
      $region41: #{_run.1} parent=5 // pred_check
        %p291 = pneg %p290
      $region42: #{_run.1} parent=5 // pred_check_branch
        %293 = sbr.rel (%p291) target = $region44
      $region43: #{_run.1} parent=5 // pred_region
        // Predicated region
        $region45: #{_run.1} parent=43 // pred_check
          %p294 = pneg %p40
        $region46: #{_run.1} parent=43 // pred_check_branch
          %296 = sbr.rel (%p294) target = $region48
        $region47: #{_run.1} parent=43 // pred_region
          %s297 = sand.u32 %s30, 1
          %s298 = scalar_lea.sflag [#allocation5], %s297
          %s299 = sand.u32 %s30, 1
          %s300 = smul.addr %s299, 8
          %s301 = scalar_lea.vmem [#allocation4], %s300
          %s303 = ssub.s32 128, 128
          %304 = vsyncadd %s298, %s303
          %s305 = smul.addr %s20, 128
          %s306 = scalar_lea.hbm %s0, %s305
          %s308 = sshll.u32 %s301, 4
          %s309 = int_to_ptr.vmem [resolvable:$true] %s308
          %311 = dma.hbm_to_vmem [thread:$0]  %s306, 128, %s309, %s298
        $region48: #{_run.1} parent=43 // pred_fallthru
          _
      $region44: #{_run.1} parent=5 // pred_fallthru
        _
      %p312 = scmp.le.s32.totalorder 1, %s20
      %p313 = scmp.lt.s32.totalorder %s20, 3
      %p314 = pnand %p312, %p313
      %p315 = pneg %p314
      // Predicated region
      $region49: #{_run.1} parent=5 // pred_check
        _
      $region50: #{_run.1} parent=5 // pred_check_branch
        %317 = sbr.rel (%p314) target = $region52
      $region51: #{_run.1} parent=5 // pred_region
        %s318 = ssub.s32 %s20, 1
        %s319 = sand.u32 %s33, 1
        %s320 = scalar_lea.sflag [#allocation5], %s319
        %s321 = sand.u32 %s33, 1
        %s322 = smul.addr %s321, 8
        %s323 = scalar_lea.vmem [#allocation4], %s322
        // Predicated region
        $region53: #{_run.1} parent=51 // pred_check
          %p324 = pneg %p46
        $region54: #{_run.1} parent=51 // pred_check_branch
          %326 = sbr.rel (%p324) target = $region56
        $region55: #{_run.1} parent=51 // pred_region
          %327 = dma.done %s320, 128
        $region56: #{_run.1} parent=51 // pred_fallthru
          _
        // Predicated region
        $region57: #{_run.1} parent=51 // pred_check
          %p328 = pneg %p67
        $region58: #{_run.1} parent=51 // pred_check_branch
          %330 = sbr.rel (%p328) target = $region60
        $region59: #{_run.1} parent=51 // pred_region
          %331 = dma.done [#allocation8], 6144
        $region60: #{_run.1} parent=51 // pred_fallthru
          _
        // Predicated region
        $region61: #{_run.1} parent=51 // pred_check
          %p332 = pneg %p109
        $region62: #{_run.1} parent=51 // pred_check_branch
          %334 = sbr.rel (%p332) target = $region64
        $region63: #{_run.1} parent=51 // pred_region
          %335 = dma.done [#allocation8], 4096
        $region64: #{_run.1} parent=51 // pred_fallthru
          _
        // Predicated region
        $region65: #{_run.1} parent=51 // pred_check
          %p336 = pneg %p130
        $region66: #{_run.1} parent=51 // pred_check_branch
          %338 = sbr.rel (%p336) target = $region68
        $region67: #{_run.1} parent=51 // pred_region
          %339 = dma.done [#allocation11], 2048
        $region68: #{_run.1} parent=51 // pred_fallthru
          _
        // Predicated region
        $region69: #{_run.1} parent=51 // pred_check
          %p340 = pneg %p172
        $region70: #{_run.1} parent=51 // pred_check_branch
          %342 = sbr.rel (%p340) target = $region72
        $region71: #{_run.1} parent=51 // pred_region
          %343 = dma.done [#allocation11], 2048
        $region72: #{_run.1} parent=51 // pred_fallthru
          _
        %s344 = sand.u32 %s33, 1
        %s345 = scalar_lea.sflag [#allocation5], %s344
        %s346 = sand.u32 %s33, 1
        %s347 = smul.addr %s346, 8
        %s348 = scalar_lea.vmem [#allocation4], %s347
        %p349 = pneg %p46
        %p350 = pneg %p43
        %p351 = pneg %p67
        %p352 = pneg %p64
        %p353 = pneg %p88
        %p354 = pneg %p85
        %p355 = pneg %p109
        %p356 = pneg %p106
        %p357 = pneg %p130
        %p358 = pneg %p127
        %p359 = pneg %p151
        %p360 = pneg %p148
        %p361 = pneg %p172
        %p362 = pneg %p169
        %p363 = pneg %p193
        %p364 = pneg %p190
        %p365 = pneg %p214
        %p366 = pneg %p211
        %p367 = scmp.eq.s32.totalorder %s25, 0
        // Predicated region
        $region73: #{_run.1} parent=51 // pred_check
          %p368 = pneg %p367
        $region74: #{_run.1} parent=51 // pred_check_branch
          %370 = sbr.rel (%p368) target = $region76
        $region75: #{_run.1} parent=51 // pred_region
          %371 = vst [vmem:[#allocation2] sm:$0x1] 0.0
        $region76: #{_run.1} parent=51 // pred_fallthru
          _
        %v372 = vld [vmem:[%s323] sm:$0xff]
        %v373 = vld [vmem:[#allocation7] sm:$0xff]
        %v374 = vld [vmem:[#allocation7 + $0x8] sm:$0xff]
        %v375 = vld [vmem:[#allocation7 + $0x10] sm:$0xff]
        %v376 = vld [vmem:[#allocation7 + $0x18] sm:$0xff]
        %v377 = vld [vmem:[#allocation7 + $0x20] sm:$0xff]
        %v378 = vld [vmem:[#allocation7 + $0x28] sm:$0xff]
        %v379 = vld [vmem:[#allocation7 + $0x30] sm:$0xff]
        %v380 = vld [vmem:[#allocation7 + $0x38] sm:$0xff]
        %v381 = vld [vmem:[#allocation7 + $0x40] sm:$0xff]
        %v382 = vld [vmem:[#allocation7 + $0x48] sm:$0xff]
        %v383 = vld [vmem:[#allocation7 + $0x50] sm:$0xff]
        %v384 = vld [vmem:[#allocation7 + $0x58] sm:$0xff]
        %v385 = vld [vmem:[#allocation7 + $0x60] sm:$0xff]
        %v386 = vld [vmem:[#allocation7 + $0x68] sm:$0xff]
        %v387 = vld [vmem:[#allocation7 + $0x70] sm:$0xff]
        %v388 = vld [vmem:[#allocation7 + $0x78] sm:$0xff]
        %v389 = vld [vmem:[#allocation7 + $0x80] sm:$0xff]
        %v390 = vld [vmem:[#allocation7 + $0x88] sm:$0xff]
        %v391 = vld [vmem:[#allocation7 + $0x90] sm:$0xff]
        %v392 = vld [vmem:[#allocation7 + $0x98] sm:$0xff]
        %v393 = vld [vmem:[#allocation7 + $0xa0] sm:$0xff]
        %v394 = vld [vmem:[#allocation7 + $0xa8] sm:$0xff]
        %v395 = vld [vmem:[#allocation7 + $0xb0] sm:$0xff]
        %v396 = vld [vmem:[#allocation7 + $0xb8] sm:$0xff]
        %v397 = vld [vmem:[#allocation7 + $0xc0] sm:$0xff]
        %v398 = vld [vmem:[#allocation7 + $0xc8] sm:$0xff]
        %v399 = vld [vmem:[#allocation7 + $0xd0] sm:$0xff]
        %v400 = vld [vmem:[#allocation7 + $0xd8] sm:$0xff]
        %v401 = vld [vmem:[#allocation7 + $0xe0] sm:$0xff]
        %v402 = vld [vmem:[#allocation7 + $0xe8] sm:$0xff]
        %v403 = vld [vmem:[#allocation7 + $0xf0] sm:$0xff]
        %v404 = vld [vmem:[#allocation7 + $0xf8] sm:$0xff]
        %v405 = vld [vmem:[#allocation7 + $0x100] sm:$0xff]
        %v406 = vld [vmem:[#allocation7 + $0x108] sm:$0xff]
        %v407 = vld [vmem:[#allocation7 + $0x110] sm:$0xff]
        %v408 = vld [vmem:[#allocation7 + $0x118] sm:$0xff]
        %v409 = vld [vmem:[#allocation7 + $0x120] sm:$0xff]
        %v410 = vld [vmem:[#allocation7 + $0x128] sm:$0xff]
        %v411 = vld [vmem:[#allocation7 + $0x130] sm:$0xff]
        %v412 = vld [vmem:[#allocation7 + $0x138] sm:$0xff]
        %v413 = vld [vmem:[#allocation7 + $0x140] sm:$0xff]
        %v414 = vld [vmem:[#allocation7 + $0x148] sm:$0xff]
        %v415 = vld [vmem:[#allocation7 + $0x150] sm:$0xff]
        %v416 = vld [vmem:[#allocation7 + $0x158] sm:$0xff]
        %v417 = vld [vmem:[#allocation7 + $0x160] sm:$0xff]
        %v418 = vld [vmem:[#allocation7 + $0x168] sm:$0xff]
        %v419 = vld [vmem:[#allocation7 + $0x170] sm:$0xff]
        %v420 = vld [vmem:[#allocation7 + $0x178] sm:$0xff]
        %v421 = vld [vmem:[%s2] sm:$0x7]
        %v423 = vlaneseq
        %v424 = vshrl.u32 %v423, 7
        %v425 = vsub.s32 0, %v424
        %v426 = vrot.slane %v421, %v425
        %v427 = vlaneseq
        %v428 = vshrl.u32 %v427, 7
        %v429 = vsub.s32 1, %v428
        %v430 = vrot.slane %v421, %v429
        %v431 = vlaneseq
        %v432 = vshrl.u32 %v431, 7
        %v433 = vsub.s32 2, %v432
        %v434 = vrot.slane %v421, %v433
        %438 = vmatprep.subr.mxu0 %v374
        %439 = vmatpush1.msra.mxu0 %v373
        %440 = vmatprep.subr.mxu0 %v377
        %441 = vmatpush1.msra.mxu0 %v376
        %442 = vmatprep.subr.mxu0 %v380
        %443 = vmatpush1.msra.mxu0 %v379
        %444 = vmatprep.subr.mxu0 %v383
        %445 = vmatpush1.msra.mxu0 %v382
        %446 = vmatprep.subr.mxu0 %v386
        %447 = vmatpush1.msra.mxu0 %v385
        %448 = vmatprep.subr.mxu0 %v389
        %449 = vmatpush1.msra.mxu0 %v388
        %450 = vmatprep.subr.mxu0 %v392
        %451 = vmatpush1.msra.mxu0 %v391
        %452 = vmatprep.subr.mxu0 %v395
        %453 = vmatpush1.msra.mxu0 %v394
        %454 = vmatprep.subr.mxu0 %v398
        %455 = vmatpush1.msra.mxu0 %v397
        %456 = vmatprep.subr.mxu0 %v401
        %457 = vmatpush1.msra.mxu0 %v400
        %458 = vmatprep.subr.mxu0 %v404
        %459 = vmatpush1.msra.mxu0 %v403
        %460 = vmatprep.subr.mxu0 %v407
        %461 = vmatpush1.msra.mxu0 %v406
        %462 = vmatprep.subr.mxu0 %v410
        %463 = vmatpush1.msra.mxu0 %v409
        %464 = vmatprep.subr.mxu0 %v413
        %465 = vmatpush1.msra.mxu0 %v412
        %466 = vmatprep.subr.mxu0 %v416
        %467 = vmatpush1.msra.mxu0 %v415
        %468 = vmatprep.subr.mxu0 %v419
        %469 = vmatpush1.msra.mxu0 %v418
        %470 = vmatprep.subr.mxu0 0.0
        %471 = vmatpush1.msra.mxu0 0.0
        %472 = vmatprep.subr.mxu0 0.0
        %473 = vmatpush1.msra.mxu0 0.0
        %474 = vmatprep.subr.mxu0 0.0
        %475 = vmatpush1.msra.mxu0 0.0
        %476 = vmatprep.subr.mxu0 0.0
        %477 = vmatpush1.msra.mxu0 0.0
        %478 = vmatprep.subr.mxu0 0.0
        %479 = vmatpush1.msra.mxu0 0.0
        %480 = vmatprep.subr.mxu0 0.0
        %481 = vmatpush1.msra.mxu0 0.0
        %482 = vmatprep.subr.mxu0 0.0
        %483 = vmatpush1.msra.mxu0 0.0
        %484 = vmatprep.subr.mxu0 0.0
        %485 = vmatpush1.msra.mxu0 0.0
        %486 = vmatprep.subr.mxu0 0.0
        %487 = vmatpush1.msra.mxu0 0.0
        %488 = vmatprep.subr.mxu0 0.0
        %489 = vmatpush1.msra.mxu0 0.0
        %490 = vmatprep.subr.mxu0 0.0
        %491 = vmatpush1.msra.mxu0 0.0
        %492 = vmatprep.subr.mxu0 0.0
        %493 = vmatpush1.msra.mxu0 0.0
        %494 = vmatprep.subr.mxu0 0.0
        %495 = vmatpush1.msra.mxu0 0.0
        %496 = vmatprep.subr.mxu0 0.0
        %497 = vmatpush1.msra.mxu0 0.0
        %498 = vmatprep.subr.mxu0 0.0
        %499 = vmatpush1.msra.mxu0 0.0
        %500 = vmatprep.subr.mxu0 0.0
        %501 = vmatpush1.msra.mxu0 0.0
        %502 = vmatprep.mubr.f32.mxu0 0.0
        %503 = vmatmul.mubr.f32.gmra.mrb[0].mxu0 %v372
        %v504 = vpop.f32.mrb[0].mxu0
        %v505 = vadd.f32 %v426, %v504
        %v506 = vpop.f32.mrb[0].mxu0
        %v507 = vadd.f32 %v430, %v506
        %508 = vdwg.mxu0
        %509 = vmatprep.subr.mxu0 0.0
        %510 = vmatpush1.msra.mxu0 %v375
        %511 = vmatprep.subr.mxu0 0.0
        %512 = vmatpush1.msra.mxu0 %v378
        %513 = vmatprep.subr.mxu0 0.0
        %514 = vmatpush1.msra.mxu0 %v381
        %515 = vmatprep.subr.mxu0 0.0
        %516 = vmatpush1.msra.mxu0 %v384
        %517 = vmatprep.subr.mxu0 0.0
        %518 = vmatpush1.msra.mxu0 %v387
        %519 = vmatprep.subr.mxu0 0.0
        %520 = vmatpush1.msra.mxu0 %v390
        %521 = vmatprep.subr.mxu0 0.0
        %522 = vmatpush1.msra.mxu0 %v393
        %523 = vmatprep.subr.mxu0 0.0
        %524 = vmatpush1.msra.mxu0 %v396
        %525 = vmatprep.subr.mxu0 0.0
        %526 = vmatpush1.msra.mxu0 %v399
        %527 = vmatprep.subr.mxu0 0.0
        %528 = vmatpush1.msra.mxu0 %v402
        %529 = vmatprep.subr.mxu0 0.0
        %530 = vmatpush1.msra.mxu0 %v405
        %531 = vmatprep.subr.mxu0 0.0
        %532 = vmatpush1.msra.mxu0 %v408
        %533 = vmatprep.subr.mxu0 0.0
        %534 = vmatpush1.msra.mxu0 %v411
        %535 = vmatprep.subr.mxu0 0.0
        %536 = vmatpush1.msra.mxu0 %v414
        %537 = vmatprep.subr.mxu0 0.0
        %538 = vmatpush1.msra.mxu0 %v417
        %539 = vmatprep.subr.mxu0 0.0
        %540 = vmatpush1.msra.mxu0 %v420
        %541 = vmatprep.subr.mxu0 0.0
        %542 = vmatpush1.msra.mxu0 0.0
        %543 = vmatprep.subr.mxu0 0.0
        %544 = vmatpush1.msra.mxu0 0.0
        %545 = vmatprep.subr.mxu0 0.0
        %546 = vmatpush1.msra.mxu0 0.0
        %547 = vmatprep.subr.mxu0 0.0
        %548 = vmatpush1.msra.mxu0 0.0
        %549 = vmatprep.subr.mxu0 0.0
        %550 = vmatpush1.msra.mxu0 0.0
        %551 = vmatprep.subr.mxu0 0.0
        %552 = vmatpush1.msra.mxu0 0.0
        %553 = vmatprep.subr.mxu0 0.0
        %554 = vmatpush1.msra.mxu0 0.0
        %555 = vmatprep.subr.mxu0 0.0
        %556 = vmatpush1.msra.mxu0 0.0
        %557 = vmatprep.subr.mxu0 0.0
        %558 = vmatpush1.msra.mxu0 0.0
        %559 = vmatprep.subr.mxu0 0.0
        %560 = vmatpush1.msra.mxu0 0.0
        %561 = vmatprep.subr.mxu0 0.0
        %562 = vmatpush1.msra.mxu0 0.0
        %563 = vmatprep.subr.mxu0 0.0
        %564 = vmatpush1.msra.mxu0 0.0
        %565 = vmatprep.subr.mxu0 0.0
        %566 = vmatpush1.msra.mxu0 0.0
        %567 = vmatprep.subr.mxu0 0.0
        %568 = vmatpush1.msra.mxu0 0.0
        %569 = vmatprep.subr.mxu0 0.0
        %570 = vmatpush1.msra.mxu0 0.0
        %571 = vmatprep.subr.mxu0 0.0
        %572 = vmatpush1.msra.mxu0 0.0
        %573 = vmatprep.mubr.f32.mxu0 0.0
        %574 = vmatmul.mubr.f32.gmra.mrb[0].mxu0 %v372
        %v575 = vpop.f32.mrb[0].mxu0
        %v576 = vadd.f32 %v434, %v575
        %v577 = vpop.f32.mrb[0].mxu0
        %578 = vdwg.mxu0
        %579 = vst [vmem:[#allocation3] sm:$0xff] %v505
        %580 = vst [vmem:[#allocation3 + $0x8] sm:$0xff] %v507
        %581 = vst [vmem:[#allocation3 + $0x10] sm:$0xff] %v576
        %v582 = vld [vmem:[#allocation2] sm:$0x1]
        %v583 = vld [vmem:[#allocation3] ss:$8 sm:$0x7]
        %v584 = vld [vmem:[#allocation9] sm:$0xff]
        %v585 = vld [vmem:[#allocation9 + $0x8] sm:$0xff]
        %v586 = vld [vmem:[#allocation9 + $0x10] sm:$0xff]
        %v587 = vld [vmem:[#allocation9 + $0x18] sm:$0xff]
        %v588 = vld [vmem:[#allocation9 + $0x20] sm:$0xff]
        %v589 = vld [vmem:[#allocation9 + $0x28] sm:$0xff]
        %v590 = vld [vmem:[#allocation9 + $0x30] sm:$0xff]
        %v591 = vld [vmem:[#allocation9 + $0x38] sm:$0xff]
        %v592 = vld [vmem:[#allocation9 + $0x40] sm:$0xff]
        %v593 = vld [vmem:[#allocation9 + $0x48] sm:$0xff]
        %v594 = vld [vmem:[#allocation9 + $0x50] sm:$0xff]
        %v595 = vld [vmem:[#allocation9 + $0x58] sm:$0xff]
        %v596 = vld [vmem:[#allocation9 + $0x60] sm:$0xff]
        %v597 = vld [vmem:[#allocation9 + $0x68] sm:$0xff]
        %v598 = vld [vmem:[#allocation9 + $0x70] sm:$0xff]
        %v599 = vld [vmem:[#allocation9 + $0x78] sm:$0xff]
        %v600 = vld [vmem:[#allocation9 + $0x80] sm:$0xff]
        %v601 = vld [vmem:[#allocation9 + $0x88] sm:$0xff]
        %v602 = vld [vmem:[#allocation9 + $0x90] sm:$0xff]
        %v603 = vld [vmem:[#allocation9 + $0x98] sm:$0xff]
        %v604 = vld [vmem:[#allocation9 + $0xa0] sm:$0xff]
        %v605 = vld [vmem:[#allocation9 + $0xa8] sm:$0xff]
        %v606 = vld [vmem:[#allocation9 + $0xb0] sm:$0xff]
        %v607 = vld [vmem:[#allocation9 + $0xb8] sm:$0xff]
        %v608 = vld [vmem:[#allocation9 + $0xc0] sm:$0xff]
        %v609 = vld [vmem:[#allocation9 + $0xc8] sm:$0xff]
        %v610 = vld [vmem:[#allocation9 + $0xd0] sm:$0xff]
        %v611 = vld [vmem:[#allocation9 + $0xd8] sm:$0xff]
        %v612 = vld [vmem:[#allocation9 + $0xe0] sm:$0xff]
        %v613 = vld [vmem:[#allocation9 + $0xe8] sm:$0xff]
        %v614 = vld [vmem:[#allocation9 + $0xf0] sm:$0xff]
        %v615 = vld [vmem:[#allocation9 + $0xf8] sm:$0xff]
        %616 = vmatprep.subr.mxu0 %v585
        %617 = vmatpush1.msra.mxu0 %v584
        %618 = vmatprep.subr.mxu0 %v587
        %619 = vmatpush1.msra.mxu0 %v586
        %620 = vmatprep.subr.mxu0 %v589
        %621 = vmatpush1.msra.mxu0 %v588
        %622 = vmatprep.subr.mxu0 %v591
        %623 = vmatpush1.msra.mxu0 %v590
        %624 = vmatprep.subr.mxu0 %v593
        %625 = vmatpush1.msra.mxu0 %v592
        %626 = vmatprep.subr.mxu0 %v595
        %627 = vmatpush1.msra.mxu0 %v594
        %628 = vmatprep.subr.mxu0 %v597
        %629 = vmatpush1.msra.mxu0 %v596
        %630 = vmatprep.subr.mxu0 %v599
        %631 = vmatpush1.msra.mxu0 %v598
        %632 = vmatprep.subr.mxu0 %v601
        %633 = vmatpush1.msra.mxu0 %v600
        %634 = vmatprep.subr.mxu0 %v603
        %635 = vmatpush1.msra.mxu0 %v602
        %636 = vmatprep.subr.mxu0 %v605
        %637 = vmatpush1.msra.mxu0 %v604
        %638 = vmatprep.subr.mxu0 %v607
        %639 = vmatpush1.msra.mxu0 %v606
        %640 = vmatprep.subr.mxu0 %v609
        %641 = vmatpush1.msra.mxu0 %v608
        %642 = vmatprep.subr.mxu0 %v611
        %643 = vmatpush1.msra.mxu0 %v610
        %644 = vmatprep.subr.mxu0 %v613
        %645 = vmatpush1.msra.mxu0 %v612
        %646 = vmatprep.subr.mxu0 %v615
        %647 = vmatpush1.msra.mxu0 %v614
        %648 = vmatprep.subr.mxu0 0.0
        %649 = vmatpush1.msra.mxu0 0.0
        %650 = vmatprep.subr.mxu0 0.0
        %651 = vmatpush1.msra.mxu0 0.0
        %652 = vmatprep.subr.mxu0 0.0
        %653 = vmatpush1.msra.mxu0 0.0
        %654 = vmatprep.subr.mxu0 0.0
        %655 = vmatpush1.msra.mxu0 0.0
        %656 = vmatprep.subr.mxu0 0.0
        %657 = vmatpush1.msra.mxu0 0.0
        %658 = vmatprep.subr.mxu0 0.0
        %659 = vmatpush1.msra.mxu0 0.0
        %660 = vmatprep.subr.mxu0 0.0
        %661 = vmatpush1.msra.mxu0 0.0
        %662 = vmatprep.subr.mxu0 0.0
        %663 = vmatpush1.msra.mxu0 0.0
        %664 = vmatprep.subr.mxu0 0.0
        %665 = vmatpush1.msra.mxu0 0.0
        %666 = vmatprep.subr.mxu0 0.0
        %667 = vmatpush1.msra.mxu0 0.0
        %668 = vmatprep.subr.mxu0 0.0
        %669 = vmatpush1.msra.mxu0 0.0
        %670 = vmatprep.subr.mxu0 0.0
        %671 = vmatpush1.msra.mxu0 0.0
        %672 = vmatprep.subr.mxu0 0.0
        %673 = vmatpush1.msra.mxu0 0.0
        %674 = vmatprep.subr.mxu0 0.0
        %675 = vmatpush1.msra.mxu0 0.0
        %676 = vmatprep.subr.mxu0 0.0
        %677 = vmatpush1.msra.mxu0 0.0
        %678 = vmatprep.subr.mxu0 0.0
        %679 = vmatpush1.msra.mxu0 0.0
        %680 = vmatprep.mubr.f32.mxu0 0.0
        %681 = vmatmul.mubr.f32.gmra.mrb[0].mxu0 %v582
        %v682 = vpop.f32.mrb[0].mxu0
        %v683 = vadd.f32 0.0, %v682
        %v684 = vpop.f32.mrb[0].mxu0
        %v685 = vadd.f32 0.0, %v684
        %686 = vdwg.mxu0
        %v689 = vcombine.low %v683, %v685
        %v691 = vunpack.c.l.s4 1966171168
        %v692 = vunpack.c.0.s8 %v691
        %v693 = vlaneseq
        %v694 = vshrl.u32 %v693, 7
        %v695 = vsub.s32 %v692, %v694
        %v696 = vrot.slane %v689, %v695
        %v698 = vunpack.c.l.s4 1966171168
        %v699 = vunpack.c.0.s8 %v698
        %v700 = vlaneseq
        %v701 = vshrl.u32 %v700, 7
        %v702 = vsub.s32 %v699, %v701
        %v703 = vrot.slane %v696, %v702
        %v705 = vadd.f32 %v583, %v703
        %v706 = vxor.u32 %v705, 2147483648
        %v707 = vmul.f32 %v706, 1.442695
        %v708 = vpow.pop %v707
        %v709 = vadd.f32 %v708, 1.0
        %v710 = vrcp.pop %v709
        %v711 = vmul.f32 1.0, %v710
        %v713 = vrot.slane %v583, 2
        %v715 = vtanh.pop %v713
        %v716 = vmul.f32 %v582, %v711
        %v718 = vrot.slane %v711, 1
        %v720 = vmul.f32 %v718, %v715
        %v721 = vadd.f32 %v716, %v720
        %s722 = scalar_lea.vmem [#allocation3], 1
        %v723 = vld [vmem:[%s722] ss:$8 sm:$0x7]
        %724 = vmatprep.subr.mxu0 %v585
        %725 = vmatpush1.msra.mxu0 %v584
        %726 = vmatprep.subr.mxu0 %v587
        %727 = vmatpush1.msra.mxu0 %v586
        %728 = vmatprep.subr.mxu0 %v589
        %729 = vmatpush1.msra.mxu0 %v588
        %730 = vmatprep.subr.mxu0 %v591
        %731 = vmatpush1.msra.mxu0 %v590
        %732 = vmatprep.subr.mxu0 %v593
        %733 = vmatpush1.msra.mxu0 %v592
        %734 = vmatprep.subr.mxu0 %v595
        %735 = vmatpush1.msra.mxu0 %v594
        %736 = vmatprep.subr.mxu0 %v597
        %737 = vmatpush1.msra.mxu0 %v596
        %738 = vmatprep.subr.mxu0 %v599
        %739 = vmatpush1.msra.mxu0 %v598
        %740 = vmatprep.subr.mxu0 %v601
        %741 = vmatpush1.msra.mxu0 %v600
        %742 = vmatprep.subr.mxu0 %v603
        %743 = vmatpush1.msra.mxu0 %v602
        %744 = vmatprep.subr.mxu0 %v605
        %745 = vmatpush1.msra.mxu0 %v604
        %746 = vmatprep.subr.mxu0 %v607
        %747 = vmatpush1.msra.mxu0 %v606
        %748 = vmatprep.subr.mxu0 %v609
        %749 = vmatpush1.msra.mxu0 %v608
        %750 = vmatprep.subr.mxu0 %v611
        %751 = vmatpush1.msra.mxu0 %v610
        %752 = vmatprep.subr.mxu0 %v613
        %753 = vmatpush1.msra.mxu0 %v612
        %754 = vmatprep.subr.mxu0 %v615
        %755 = vmatpush1.msra.mxu0 %v614
        %756 = vmatprep.subr.mxu0 0.0
        %757 = vmatpush1.msra.mxu0 0.0
        %758 = vmatprep.subr.mxu0 0.0
        %759 = vmatpush1.msra.mxu0 0.0
        %760 = vmatprep.subr.mxu0 0.0
        %761 = vmatpush1.msra.mxu0 0.0
        %762 = vmatprep.subr.mxu0 0.0
        %763 = vmatpush1.msra.mxu0 0.0
        %764 = vmatprep.subr.mxu0 0.0
        %765 = vmatpush1.msra.mxu0 0.0
        %766 = vmatprep.subr.mxu0 0.0
        %767 = vmatpush1.msra.mxu0 0.0
        %768 = vmatprep.subr.mxu0 0.0
        %769 = vmatpush1.msra.mxu0 0.0
        %770 = vmatprep.subr.mxu0 0.0
        %771 = vmatpush1.msra.mxu0 0.0
        %772 = vmatprep.subr.mxu0 0.0
        %773 = vmatpush1.msra.mxu0 0.0
        %774 = vmatprep.subr.mxu0 0.0
        %775 = vmatpush1.msra.mxu0 0.0
        %776 = vmatprep.subr.mxu0 0.0
        %777 = vmatpush1.msra.mxu0 0.0
        %778 = vmatprep.subr.mxu0 0.0
        %779 = vmatpush1.msra.mxu0 0.0
        %780 = vmatprep.subr.mxu0 0.0
        %781 = vmatpush1.msra.mxu0 0.0
        %782 = vmatprep.subr.mxu0 0.0
        %783 = vmatpush1.msra.mxu0 0.0
        %784 = vmatprep.subr.mxu0 0.0
        %785 = vmatpush1.msra.mxu0 0.0
        %786 = vmatprep.subr.mxu0 0.0
        %787 = vmatpush1.msra.mxu0 0.0
        %788 = vmatprep.mubr.f32.mxu0 0.0
        %789 = vmatmul.mubr.f32.gmra.mrb[0].mxu0 %v721
        %v790 = vpop.f32.mrb[0].mxu0
        %v791 = vadd.f32 0.0, %v790
        %v792 = vpop.f32.mrb[0].mxu0
        %v793 = vadd.f32 0.0, %v792
        %794 = vdwg.mxu0
        %v797 = vcombine.low %v791, %v793
        %v799 = vunpack.c.l.s4 1966171168
        %v800 = vunpack.c.0.s8 %v799
        %v801 = vlaneseq
        %v802 = vshrl.u32 %v801, 7
        %v803 = vsub.s32 %v800, %v802
        %v804 = vrot.slane %v797, %v803
        %v806 = vunpack.c.l.s4 1966171168
        %v807 = vunpack.c.0.s8 %v806
        %v808 = vlaneseq
        %v809 = vshrl.u32 %v808, 7
        %v810 = vsub.s32 %v807, %v809
        %v811 = vrot.slane %v804, %v810
        %v813 = vadd.f32 %v723, %v811
        %v814 = vxor.u32 %v813, 2147483648
        %v815 = vmul.f32 %v814, 1.442695
        %v816 = vpow.pop %v815
        %v817 = vadd.f32 %v816, 1.0
        %v818 = vrcp.pop %v817
        %v819 = vmul.f32 1.0, %v818
        %v821 = vrot.slane %v723, 2
        %v823 = vtanh.pop %v821
        %v824 = vmul.f32 %v721, %v819
        %v826 = vrot.slane %v819, 1
        %v828 = vmul.f32 %v826, %v823
        %v829 = vadd.f32 %v824, %v828
        %s830 = scalar_lea.vmem [#allocation3], 2
        %v831 = vld [vmem:[%s830] ss:$8 sm:$0x7]
        %832 = vmatprep.subr.mxu0 %v585
        %833 = vmatpush1.msra.mxu0 %v584
        %834 = vmatprep.subr.mxu0 %v587
        %835 = vmatpush1.msra.mxu0 %v586
        %836 = vmatprep.subr.mxu0 %v589
        %837 = vmatpush1.msra.mxu0 %v588
        %838 = vmatprep.subr.mxu0 %v591
        %839 = vmatpush1.msra.mxu0 %v590
        %840 = vmatprep.subr.mxu0 %v593
        %841 = vmatpush1.msra.mxu0 %v592
        %842 = vmatprep.subr.mxu0 %v595
        %843 = vmatpush1.msra.mxu0 %v594
        %844 = vmatprep.subr.mxu0 %v597
        %845 = vmatpush1.msra.mxu0 %v596
        %846 = vmatprep.subr.mxu0 %v599
        %847 = vmatpush1.msra.mxu0 %v598
        %848 = vmatprep.subr.mxu0 %v601
        %849 = vmatpush1.msra.mxu0 %v600
        %850 = vmatprep.subr.mxu0 %v603
        %851 = vmatpush1.msra.mxu0 %v602
        %852 = vmatprep.subr.mxu0 %v605
        %853 = vmatpush1.msra.mxu0 %v604
        %854 = vmatprep.subr.mxu0 %v607
        %855 = vmatpush1.msra.mxu0 %v606
        %856 = vmatprep.subr.mxu0 %v609
        %857 = vmatpush1.msra.mxu0 %v608
        %858 = vmatprep.subr.mxu0 %v611
        %859 = vmatpush1.msra.mxu0 %v610
        %860 = vmatprep.subr.mxu0 %v613
        %861 = vmatpush1.msra.mxu0 %v612
        %862 = vmatprep.subr.mxu0 %v615
        %863 = vmatpush1.msra.mxu0 %v614
        %864 = vmatprep.subr.mxu0 0.0
        %865 = vmatpush1.msra.mxu0 0.0
        %866 = vmatprep.subr.mxu0 0.0
        %867 = vmatpush1.msra.mxu0 0.0
        %868 = vmatprep.subr.mxu0 0.0
        %869 = vmatpush1.msra.mxu0 0.0
        %870 = vmatprep.subr.mxu0 0.0
        %871 = vmatpush1.msra.mxu0 0.0
        %872 = vmatprep.subr.mxu0 0.0
        %873 = vmatpush1.msra.mxu0 0.0
        %874 = vmatprep.subr.mxu0 0.0
        %875 = vmatpush1.msra.mxu0 0.0
        %876 = vmatprep.subr.mxu0 0.0
        %877 = vmatpush1.msra.mxu0 0.0
        %878 = vmatprep.subr.mxu0 0.0
        %879 = vmatpush1.msra.mxu0 0.0
        %880 = vmatprep.subr.mxu0 0.0
        %881 = vmatpush1.msra.mxu0 0.0
        %882 = vmatprep.subr.mxu0 0.0
        %883 = vmatpush1.msra.mxu0 0.0
        %884 = vmatprep.subr.mxu0 0.0
        %885 = vmatpush1.msra.mxu0 0.0
        %886 = vmatprep.subr.mxu0 0.0
        %887 = vmatpush1.msra.mxu0 0.0
        %888 = vmatprep.subr.mxu0 0.0
        %889 = vmatpush1.msra.mxu0 0.0
        %890 = vmatprep.subr.mxu0 0.0
        %891 = vmatpush1.msra.mxu0 0.0
        %892 = vmatprep.subr.mxu0 0.0
        %893 = vmatpush1.msra.mxu0 0.0
        %894 = vmatprep.subr.mxu0 0.0
        %895 = vmatpush1.msra.mxu0 0.0
        %896 = vmatprep.mubr.f32.mxu0 0.0
        %897 = vmatmul.mubr.f32.gmra.mrb[0].mxu0 %v829
        %v898 = vpop.f32.mrb[0].mxu0
        %v899 = vadd.f32 0.0, %v898
        %v900 = vpop.f32.mrb[0].mxu0
        %v901 = vadd.f32 0.0, %v900
        %902 = vdwg.mxu0
        %v905 = vcombine.low %v899, %v901
        %v907 = vunpack.c.l.s4 1966171168
        %v908 = vunpack.c.0.s8 %v907
        %v909 = vlaneseq
        %v910 = vshrl.u32 %v909, 7
        %v911 = vsub.s32 %v908, %v910
        %v912 = vrot.slane %v905, %v911
        %v914 = vunpack.c.l.s4 1966171168
        %v915 = vunpack.c.0.s8 %v914
        %v916 = vlaneseq
        %v917 = vshrl.u32 %v916, 7
        %v918 = vsub.s32 %v915, %v917
        %v919 = vrot.slane %v912, %v918
        %v921 = vadd.f32 %v831, %v919
        %v922 = vxor.u32 %v921, 2147483648
        %v923 = vmul.f32 %v922, 1.442695
        %v924 = vpow.pop %v923
        %v925 = vadd.f32 %v924, 1.0
        %v926 = vrcp.pop %v925
        %v927 = vmul.f32 1.0, %v926
        %v929 = vrot.slane %v831, 2
        %v931 = vtanh.pop %v929
        %v932 = vmul.f32 %v829, %v927
        %v934 = vrot.slane %v927, 1
        %v936 = vmul.f32 %v934, %v931
        %v937 = vadd.f32 %v932, %v936
        %s938 = scalar_lea.vmem [#allocation3], 3
        %v939 = vld [vmem:[%s938] ss:$8 sm:$0x7]
        %940 = vmatprep.subr.mxu0 %v585
        %941 = vmatpush1.msra.mxu0 %v584
        %942 = vmatprep.subr.mxu0 %v587
        %943 = vmatpush1.msra.mxu0 %v586
        %944 = vmatprep.subr.mxu0 %v589
        %945 = vmatpush1.msra.mxu0 %v588
        %946 = vmatprep.subr.mxu0 %v591
        %947 = vmatpush1.msra.mxu0 %v590
        %948 = vmatprep.subr.mxu0 %v593
        %949 = vmatpush1.msra.mxu0 %v592
        %950 = vmatprep.subr.mxu0 %v595
        %951 = vmatpush1.msra.mxu0 %v594
        %952 = vmatprep.subr.mxu0 %v597
        %953 = vmatpush1.msra.mxu0 %v596
        %954 = vmatprep.subr.mxu0 %v599
        %955 = vmatpush1.msra.mxu0 %v598
        %956 = vmatprep.subr.mxu0 %v601
        %957 = vmatpush1.msra.mxu0 %v600
        %958 = vmatprep.subr.mxu0 %v603
        %959 = vmatpush1.msra.mxu0 %v602
        %960 = vmatprep.subr.mxu0 %v605
        %961 = vmatpush1.msra.mxu0 %v604
        %962 = vmatprep.subr.mxu0 %v607
        %963 = vmatpush1.msra.mxu0 %v606
        %964 = vmatprep.subr.mxu0 %v609
        %965 = vmatpush1.msra.mxu0 %v608
        %966 = vmatprep.subr.mxu0 %v611
        %967 = vmatpush1.msra.mxu0 %v610
        %968 = vmatprep.subr.mxu0 %v613
        %969 = vmatpush1.msra.mxu0 %v612
        %970 = vmatprep.subr.mxu0 %v615
        %971 = vmatpush1.msra.mxu0 %v614
        %972 = vmatprep.subr.mxu0 0.0
        %973 = vmatpush1.msra.mxu0 0.0
        %974 = vmatprep.subr.mxu0 0.0
        %975 = vmatpush1.msra.mxu0 0.0
        %976 = vmatprep.subr.mxu0 0.0
        %977 = vmatpush1.msra.mxu0 0.0
        %978 = vmatprep.subr.mxu0 0.0
        %979 = vmatpush1.msra.mxu0 0.0
        %980 = vmatprep.subr.mxu0 0.0
        %981 = vmatpush1.msra.mxu0 0.0
        %982 = vmatprep.subr.mxu0 0.0
        %983 = vmatpush1.msra.mxu0 0.0
        %984 = vmatprep.subr.mxu0 0.0
        %985 = vmatpush1.msra.mxu0 0.0
        %986 = vmatprep.subr.mxu0 0.0
        %987 = vmatpush1.msra.mxu0 0.0
        %988 = vmatprep.subr.mxu0 0.0
        %989 = vmatpush1.msra.mxu0 0.0
        %990 = vmatprep.subr.mxu0 0.0
        %991 = vmatpush1.msra.mxu0 0.0
        %992 = vmatprep.subr.mxu0 0.0
        %993 = vmatpush1.msra.mxu0 0.0
        %994 = vmatprep.subr.mxu0 0.0
        %995 = vmatpush1.msra.mxu0 0.0
        %996 = vmatprep.subr.mxu0 0.0
        %997 = vmatpush1.msra.mxu0 0.0
        %998 = vmatprep.subr.mxu0 0.0
        %999 = vmatpush1.msra.mxu0 0.0
        %1000 = vmatprep.subr.mxu0 0.0
        %1001 = vmatpush1.msra.mxu0 0.0
        %1002 = vmatprep.subr.mxu0 0.0
        %1003 = vmatpush1.msra.mxu0 0.0
        %1004 = vmatprep.mubr.f32.mxu0 0.0
        %1005 = vmatmul.mubr.f32.gmra.mrb[0].mxu0 %v937
        %v1006 = vpop.f32.mrb[0].mxu0
        %v1007 = vadd.f32 0.0, %v1006
        %v1008 = vpop.f32.mrb[0].mxu0
        %v1009 = vadd.f32 0.0, %v1008
        %1010 = vdwg.mxu0
        %v1013 = vcombine.low %v1007, %v1009
        %v1015 = vunpack.c.l.s4 1966171168
        %v1016 = vunpack.c.0.s8 %v1015
        %v1017 = vlaneseq
        %v1018 = vshrl.u32 %v1017, 7
        %v1019 = vsub.s32 %v1016, %v1018
        %v1020 = vrot.slane %v1013, %v1019
        %v1022 = vunpack.c.l.s4 1966171168
        %v1023 = vunpack.c.0.s8 %v1022
        %v1024 = vlaneseq
        %v1025 = vshrl.u32 %v1024, 7
        %v1026 = vsub.s32 %v1023, %v1025
        %v1027 = vrot.slane %v1020, %v1026
        %v1029 = vadd.f32 %v939, %v1027
        %v1030 = vxor.u32 %v1029, 2147483648
        %v1031 = vmul.f32 %v1030, 1.442695
        %v1032 = vpow.pop %v1031
        %v1033 = vadd.f32 %v1032, 1.0
        %v1034 = vrcp.pop %v1033
        %v1035 = vmul.f32 1.0, %v1034
        %v1037 = vrot.slane %v939, 2
        %v1039 = vtanh.pop %v1037
        %v1040 = vmul.f32 %v937, %v1035
        %v1042 = vrot.slane %v1035, 1
        %v1044 = vmul.f32 %v1042, %v1039
        %v1045 = vadd.f32 %v1040, %v1044
        %s1046 = scalar_lea.vmem [#allocation3], 4
        %v1047 = vld [vmem:[%s1046] ss:$8 sm:$0x7]
        %1048 = vmatprep.subr.mxu0 %v585
        %1049 = vmatpush1.msra.mxu0 %v584
        %1050 = vmatprep.subr.mxu0 %v587
        %1051 = vmatpush1.msra.mxu0 %v586
        %1052 = vmatprep.subr.mxu0 %v589
        %1053 = vmatpush1.msra.mxu0 %v588
        %1054 = vmatprep.subr.mxu0 %v591
        %1055 = vmatpush1.msra.mxu0 %v590
        %1056 = vmatprep.subr.mxu0 %v593
        %1057 = vmatpush1.msra.mxu0 %v592
        %1058 = vmatprep.subr.mxu0 %v595
        %1059 = vmatpush1.msra.mxu0 %v594
        %1060 = vmatprep.subr.mxu0 %v597
        %1061 = vmatpush1.msra.mxu0 %v596
        %1062 = vmatprep.subr.mxu0 %v599
        %1063 = vmatpush1.msra.mxu0 %v598
        %1064 = vmatprep.subr.mxu0 %v601
        %1065 = vmatpush1.msra.mxu0 %v600
        %1066 = vmatprep.subr.mxu0 %v603
        %1067 = vmatpush1.msra.mxu0 %v602
        %1068 = vmatprep.subr.mxu0 %v605
        %1069 = vmatpush1.msra.mxu0 %v604
        %1070 = vmatprep.subr.mxu0 %v607
        %1071 = vmatpush1.msra.mxu0 %v606
        %1072 = vmatprep.subr.mxu0 %v609
        %1073 = vmatpush1.msra.mxu0 %v608
        %1074 = vmatprep.subr.mxu0 %v611
        %1075 = vmatpush1.msra.mxu0 %v610
        %1076 = vmatprep.subr.mxu0 %v613
        %1077 = vmatpush1.msra.mxu0 %v612
        %1078 = vmatprep.subr.mxu0 %v615
        %1079 = vmatpush1.msra.mxu0 %v614
        %1080 = vmatprep.subr.mxu0 0.0
        %1081 = vmatpush1.msra.mxu0 0.0
        %1082 = vmatprep.subr.mxu0 0.0
        %1083 = vmatpush1.msra.mxu0 0.0
        %1084 = vmatprep.subr.mxu0 0.0
        %1085 = vmatpush1.msra.mxu0 0.0
        %1086 = vmatprep.subr.mxu0 0.0
        %1087 = vmatpush1.msra.mxu0 0.0
        %1088 = vmatprep.subr.mxu0 0.0
        %1089 = vmatpush1.msra.mxu0 0.0
        %1090 = vmatprep.subr.mxu0 0.0
        %1091 = vmatpush1.msra.mxu0 0.0
        %1092 = vmatprep.subr.mxu0 0.0
        %1093 = vmatpush1.msra.mxu0 0.0
        %1094 = vmatprep.subr.mxu0 0.0
        %1095 = vmatpush1.msra.mxu0 0.0
        %1096 = vmatprep.subr.mxu0 0.0
        %1097 = vmatpush1.msra.mxu0 0.0
        %1098 = vmatprep.subr.mxu0 0.0
        %1099 = vmatpush1.msra.mxu0 0.0
        %1100 = vmatprep.subr.mxu0 0.0
        %1101 = vmatpush1.msra.mxu0 0.0
        %1102 = vmatprep.subr.mxu0 0.0
        %1103 = vmatpush1.msra.mxu0 0.0
        %1104 = vmatprep.subr.mxu0 0.0
        %1105 = vmatpush1.msra.mxu0 0.0
        %1106 = vmatprep.subr.mxu0 0.0
        %1107 = vmatpush1.msra.mxu0 0.0
        %1108 = vmatprep.subr.mxu0 0.0
        %1109 = vmatpush1.msra.mxu0 0.0
        %1110 = vmatprep.subr.mxu0 0.0
        %1111 = vmatpush1.msra.mxu0 0.0
        %1112 = vmatprep.mubr.f32.mxu0 0.0
        %1113 = vmatmul.mubr.f32.gmra.mrb[0].mxu0 %v1045
        %v1114 = vpop.f32.mrb[0].mxu0
        %v1115 = vadd.f32 0.0, %v1114
        %v1116 = vpop.f32.mrb[0].mxu0
        %v1117 = vadd.f32 0.0, %v1116
        %1118 = vdwg.mxu0
        %v1121 = vcombine.low %v1115, %v1117
        %v1123 = vunpack.c.l.s4 1966171168
        %v1124 = vunpack.c.0.s8 %v1123
        %v1125 = vlaneseq
        %v1126 = vshrl.u32 %v1125, 7
        %v1127 = vsub.s32 %v1124, %v1126
        %v1128 = vrot.slane %v1121, %v1127
        %v1130 = vunpack.c.l.s4 1966171168
        %v1131 = vunpack.c.0.s8 %v1130
        %v1132 = vlaneseq
        %v1133 = vshrl.u32 %v1132, 7
        %v1134 = vsub.s32 %v1131, %v1133
        %v1135 = vrot.slane %v1128, %v1134
        %v1137 = vadd.f32 %v1047, %v1135
        %v1138 = vxor.u32 %v1137, 2147483648
        %v1139 = vmul.f32 %v1138, 1.442695
        %v1140 = vpow.pop %v1139
        %v1141 = vadd.f32 %v1140, 1.0
        %v1142 = vrcp.pop %v1141
        %v1143 = vmul.f32 1.0, %v1142
        %v1145 = vrot.slane %v1047, 2
        %v1147 = vtanh.pop %v1145
        %v1148 = vmul.f32 %v1045, %v1143
        %v1150 = vrot.slane %v1143, 1
        %v1152 = vmul.f32 %v1150, %v1147
        %v1153 = vadd.f32 %v1148, %v1152
        %s1154 = scalar_lea.vmem [#allocation3], 5
        %v1155 = vld [vmem:[%s1154] ss:$8 sm:$0x7]
        %1156 = vmatprep.subr.mxu0 %v585
        %1157 = vmatpush1.msra.mxu0 %v584
        %1158 = vmatprep.subr.mxu0 %v587
        %1159 = vmatpush1.msra.mxu0 %v586
        %1160 = vmatprep.subr.mxu0 %v589
        %1161 = vmatpush1.msra.mxu0 %v588
        %1162 = vmatprep.subr.mxu0 %v591
        %1163 = vmatpush1.msra.mxu0 %v590
        %1164 = vmatprep.subr.mxu0 %v593
        %1165 = vmatpush1.msra.mxu0 %v592
        %1166 = vmatprep.subr.mxu0 %v595
        %1167 = vmatpush1.msra.mxu0 %v594
        %1168 = vmatprep.subr.mxu0 %v597
        %1169 = vmatpush1.msra.mxu0 %v596
        %1170 = vmatprep.subr.mxu0 %v599
        %1171 = vmatpush1.msra.mxu0 %v598
        %1172 = vmatprep.subr.mxu0 %v601
        %1173 = vmatpush1.msra.mxu0 %v600
        %1174 = vmatprep.subr.mxu0 %v603
        %1175 = vmatpush1.msra.mxu0 %v602
        %1176 = vmatprep.subr.mxu0 %v605
        %1177 = vmatpush1.msra.mxu0 %v604
        %1178 = vmatprep.subr.mxu0 %v607
        %1179 = vmatpush1.msra.mxu0 %v606
        %1180 = vmatprep.subr.mxu0 %v609
        %1181 = vmatpush1.msra.mxu0 %v608
        %1182 = vmatprep.subr.mxu0 %v611
        %1183 = vmatpush1.msra.mxu0 %v610
        %1184 = vmatprep.subr.mxu0 %v613
        %1185 = vmatpush1.msra.mxu0 %v612
        %1186 = vmatprep.subr.mxu0 %v615
        %1187 = vmatpush1.msra.mxu0 %v614
        %1188 = vmatprep.subr.mxu0 0.0
        %1189 = vmatpush1.msra.mxu0 0.0
        %1190 = vmatprep.subr.mxu0 0.0
        %1191 = vmatpush1.msra.mxu0 0.0
        %1192 = vmatprep.subr.mxu0 0.0
        %1193 = vmatpush1.msra.mxu0 0.0
        %1194 = vmatprep.subr.mxu0 0.0
        %1195 = vmatpush1.msra.mxu0 0.0
        %1196 = vmatprep.subr.mxu0 0.0
        %1197 = vmatpush1.msra.mxu0 0.0
        %1198 = vmatprep.subr.mxu0 0.0
        %1199 = vmatpush1.msra.mxu0 0.0
        %1200 = vmatprep.subr.mxu0 0.0
        %1201 = vmatpush1.msra.mxu0 0.0
        %1202 = vmatprep.subr.mxu0 0.0
        %1203 = vmatpush1.msra.mxu0 0.0
        %1204 = vmatprep.subr.mxu0 0.0
        %1205 = vmatpush1.msra.mxu0 0.0
        %1206 = vmatprep.subr.mxu0 0.0
        %1207 = vmatpush1.msra.mxu0 0.0
        %1208 = vmatprep.subr.mxu0 0.0
        %1209 = vmatpush1.msra.mxu0 0.0
        %1210 = vmatprep.subr.mxu0 0.0
        %1211 = vmatpush1.msra.mxu0 0.0
        %1212 = vmatprep.subr.mxu0 0.0
        %1213 = vmatpush1.msra.mxu0 0.0
        %1214 = vmatprep.subr.mxu0 0.0
        %1215 = vmatpush1.msra.mxu0 0.0
        %1216 = vmatprep.subr.mxu0 0.0
        %1217 = vmatpush1.msra.mxu0 0.0
        %1218 = vmatprep.subr.mxu0 0.0
        %1219 = vmatpush1.msra.mxu0 0.0
        %1220 = vmatprep.mubr.f32.mxu0 0.0
        %1221 = vmatmul.mubr.f32.gmra.mrb[0].mxu0 %v1153
        %v1222 = vpop.f32.mrb[0].mxu0
        %v1223 = vadd.f32 0.0, %v1222
        %v1224 = vpop.f32.mrb[0].mxu0
        %v1225 = vadd.f32 0.0, %v1224
        %1226 = vdwg.mxu0
        %v1229 = vcombine.low %v1223, %v1225
        %v1231 = vunpack.c.l.s4 1966171168
        %v1232 = vunpack.c.0.s8 %v1231
        %v1233 = vlaneseq
        %v1234 = vshrl.u32 %v1233, 7
        %v1235 = vsub.s32 %v1232, %v1234
        %v1236 = vrot.slane %v1229, %v1235
        %v1238 = vunpack.c.l.s4 1966171168
        %v1239 = vunpack.c.0.s8 %v1238
        %v1240 = vlaneseq
        %v1241 = vshrl.u32 %v1240, 7
        %v1242 = vsub.s32 %v1239, %v1241
        %v1243 = vrot.slane %v1236, %v1242
        %v1245 = vadd.f32 %v1155, %v1243
        %v1246 = vxor.u32 %v1245, 2147483648
        %v1247 = vmul.f32 %v1246, 1.442695
        %v1248 = vpow.pop %v1247
        %v1249 = vadd.f32 %v1248, 1.0
        %v1250 = vrcp.pop %v1249
        %v1251 = vmul.f32 1.0, %v1250
        %v1253 = vrot.slane %v1155, 2
        %v1255 = vtanh.pop %v1253
        %v1256 = vmul.f32 %v1153, %v1251
        %v1258 = vrot.slane %v1251, 1
        %v1260 = vmul.f32 %v1258, %v1255
        %v1261 = vadd.f32 %v1256, %v1260
        %s1262 = scalar_lea.vmem [#allocation3], 6
        %v1263 = vld [vmem:[%s1262] ss:$8 sm:$0x7]
        %1264 = vmatprep.subr.mxu0 %v585
        %1265 = vmatpush1.msra.mxu0 %v584
        %1266 = vmatprep.subr.mxu0 %v587
        %1267 = vmatpush1.msra.mxu0 %v586
        %1268 = vmatprep.subr.mxu0 %v589
        %1269 = vmatpush1.msra.mxu0 %v588
        %1270 = vmatprep.subr.mxu0 %v591
        %1271 = vmatpush1.msra.mxu0 %v590
        %1272 = vmatprep.subr.mxu0 %v593
        %1273 = vmatpush1.msra.mxu0 %v592
        %1274 = vmatprep.subr.mxu0 %v595
        %1275 = vmatpush1.msra.mxu0 %v594
        %1276 = vmatprep.subr.mxu0 %v597
        %1277 = vmatpush1.msra.mxu0 %v596
        %1278 = vmatprep.subr.mxu0 %v599
        %1279 = vmatpush1.msra.mxu0 %v598
        %1280 = vmatprep.subr.mxu0 %v601
        %1281 = vmatpush1.msra.mxu0 %v600
        %1282 = vmatprep.subr.mxu0 %v603
        %1283 = vmatpush1.msra.mxu0 %v602
        %1284 = vmatprep.subr.mxu0 %v605
        %1285 = vmatpush1.msra.mxu0 %v604
        %1286 = vmatprep.subr.mxu0 %v607
        %1287 = vmatpush1.msra.mxu0 %v606
        %1288 = vmatprep.subr.mxu0 %v609
        %1289 = vmatpush1.msra.mxu0 %v608
        %1290 = vmatprep.subr.mxu0 %v611
        %1291 = vmatpush1.msra.mxu0 %v610
        %1292 = vmatprep.subr.mxu0 %v613
        %1293 = vmatpush1.msra.mxu0 %v612
        %1294 = vmatprep.subr.mxu0 %v615
        %1295 = vmatpush1.msra.mxu0 %v614
        %1296 = vmatprep.subr.mxu0 0.0
        %1297 = vmatpush1.msra.mxu0 0.0
        %1298 = vmatprep.subr.mxu0 0.0
        %1299 = vmatpush1.msra.mxu0 0.0
        %1300 = vmatprep.subr.mxu0 0.0
        %1301 = vmatpush1.msra.mxu0 0.0
        %1302 = vmatprep.subr.mxu0 0.0
        %1303 = vmatpush1.msra.mxu0 0.0
        %1304 = vmatprep.subr.mxu0 0.0
        %1305 = vmatpush1.msra.mxu0 0.0
        %1306 = vmatprep.subr.mxu0 0.0
        %1307 = vmatpush1.msra.mxu0 0.0
        %1308 = vmatprep.subr.mxu0 0.0
        %1309 = vmatpush1.msra.mxu0 0.0
        %1310 = vmatprep.subr.mxu0 0.0
        %1311 = vmatpush1.msra.mxu0 0.0
        %1312 = vmatprep.subr.mxu0 0.0
        %1313 = vmatpush1.msra.mxu0 0.0
        %1314 = vmatprep.subr.mxu0 0.0
        %1315 = vmatpush1.msra.mxu0 0.0
        %1316 = vmatprep.subr.mxu0 0.0
        %1317 = vmatpush1.msra.mxu0 0.0
        %1318 = vmatprep.subr.mxu0 0.0
        %1319 = vmatpush1.msra.mxu0 0.0
        %1320 = vmatprep.subr.mxu0 0.0
        %1321 = vmatpush1.msra.mxu0 0.0
        %1322 = vmatprep.subr.mxu0 0.0
        %1323 = vmatpush1.msra.mxu0 0.0
        %1324 = vmatprep.subr.mxu0 0.0
        %1325 = vmatpush1.msra.mxu0 0.0
        %1326 = vmatprep.subr.mxu0 0.0
        %1327 = vmatpush1.msra.mxu0 0.0
        %1328 = vmatprep.mubr.f32.mxu0 0.0
        %1329 = vmatmul.mubr.f32.gmra.mrb[0].mxu0 %v1261
        %v1330 = vpop.f32.mrb[0].mxu0
        %v1331 = vadd.f32 0.0, %v1330
        %v1332 = vpop.f32.mrb[0].mxu0
        %v1333 = vadd.f32 0.0, %v1332
        %1334 = vdwg.mxu0
        %v1337 = vcombine.low %v1331, %v1333
        %v1339 = vunpack.c.l.s4 1966171168
        %v1340 = vunpack.c.0.s8 %v1339
        %v1341 = vlaneseq
        %v1342 = vshrl.u32 %v1341, 7
        %v1343 = vsub.s32 %v1340, %v1342
        %v1344 = vrot.slane %v1337, %v1343
        %v1346 = vunpack.c.l.s4 1966171168
        %v1347 = vunpack.c.0.s8 %v1346
        %v1348 = vlaneseq
        %v1349 = vshrl.u32 %v1348, 7
        %v1350 = vsub.s32 %v1347, %v1349
        %v1351 = vrot.slane %v1344, %v1350
        %v1353 = vadd.f32 %v1263, %v1351
        %v1354 = vxor.u32 %v1353, 2147483648
        %v1355 = vmul.f32 %v1354, 1.442695
        %v1356 = vpow.pop %v1355
        %v1357 = vadd.f32 %v1356, 1.0
        %v1358 = vrcp.pop %v1357
        %v1359 = vmul.f32 1.0, %v1358
        %v1361 = vrot.slane %v1263, 2
        %v1363 = vtanh.pop %v1361
        %v1364 = vmul.f32 %v1261, %v1359
        %v1366 = vrot.slane %v1359, 1
        %v1368 = vmul.f32 %v1366, %v1363
        %v1369 = vadd.f32 %v1364, %v1368
        %s1370 = scalar_lea.vmem [#allocation3], 7
        %v1371 = vld [vmem:[%s1370] ss:$8 sm:$0x7]
        %1372 = vmatprep.subr.mxu0 %v585
        %1373 = vmatpush1.msra.mxu0 %v584
        %1374 = vmatprep.subr.mxu0 %v587
        %1375 = vmatpush1.msra.mxu0 %v586
        %1376 = vmatprep.subr.mxu0 %v589
        %1377 = vmatpush1.msra.mxu0 %v588
        %1378 = vmatprep.subr.mxu0 %v591
        %1379 = vmatpush1.msra.mxu0 %v590
        %1380 = vmatprep.subr.mxu0 %v593
        %1381 = vmatpush1.msra.mxu0 %v592
        %1382 = vmatprep.subr.mxu0 %v595
        %1383 = vmatpush1.msra.mxu0 %v594
        %1384 = vmatprep.subr.mxu0 %v597
        %1385 = vmatpush1.msra.mxu0 %v596
        %1386 = vmatprep.subr.mxu0 %v599
        %1387 = vmatpush1.msra.mxu0 %v598
        %1388 = vmatprep.subr.mxu0 %v601
        %1389 = vmatpush1.msra.mxu0 %v600
        %1390 = vmatprep.subr.mxu0 %v603
        %1391 = vmatpush1.msra.mxu0 %v602
        %1392 = vmatprep.subr.mxu0 %v605
        %1393 = vmatpush1.msra.mxu0 %v604
        %1394 = vmatprep.subr.mxu0 %v607
        %1395 = vmatpush1.msra.mxu0 %v606
        %1396 = vmatprep.subr.mxu0 %v609
        %1397 = vmatpush1.msra.mxu0 %v608
        %1398 = vmatprep.subr.mxu0 %v611
        %1399 = vmatpush1.msra.mxu0 %v610
        %1400 = vmatprep.subr.mxu0 %v613
        %1401 = vmatpush1.msra.mxu0 %v612
        %1402 = vmatprep.subr.mxu0 %v615
        %1403 = vmatpush1.msra.mxu0 %v614
        %1404 = vmatprep.subr.mxu0 0.0
        %1405 = vmatpush1.msra.mxu0 0.0
        %1406 = vmatprep.subr.mxu0 0.0
        %1407 = vmatpush1.msra.mxu0 0.0
        %1408 = vmatprep.subr.mxu0 0.0
        %1409 = vmatpush1.msra.mxu0 0.0
        %1410 = vmatprep.subr.mxu0 0.0
        %1411 = vmatpush1.msra.mxu0 0.0
        %1412 = vmatprep.subr.mxu0 0.0
        %1413 = vmatpush1.msra.mxu0 0.0
        %1414 = vmatprep.subr.mxu0 0.0
        %1415 = vmatpush1.msra.mxu0 0.0
        %1416 = vmatprep.subr.mxu0 0.0
        %1417 = vmatpush1.msra.mxu0 0.0
        %1418 = vmatprep.subr.mxu0 0.0
        %1419 = vmatpush1.msra.mxu0 0.0
        %1420 = vmatprep.subr.mxu0 0.0
        %1421 = vmatpush1.msra.mxu0 0.0
        %1422 = vmatprep.subr.mxu0 0.0
        %1423 = vmatpush1.msra.mxu0 0.0
        %1424 = vmatprep.subr.mxu0 0.0
        %1425 = vmatpush1.msra.mxu0 0.0
        %1426 = vmatprep.subr.mxu0 0.0
        %1427 = vmatpush1.msra.mxu0 0.0
        %1428 = vmatprep.subr.mxu0 0.0
        %1429 = vmatpush1.msra.mxu0 0.0
        %1430 = vmatprep.subr.mxu0 0.0
        %1431 = vmatpush1.msra.mxu0 0.0
        %1432 = vmatprep.subr.mxu0 0.0
        %1433 = vmatpush1.msra.mxu0 0.0
        %1434 = vmatprep.subr.mxu0 0.0
        %1435 = vmatpush1.msra.mxu0 0.0
        %1436 = vmatprep.mubr.f32.mxu0 0.0
        %1437 = vmatmul.mubr.f32.gmra.mrb[0].mxu0 %v1369
        %v1438 = vpop.f32.mrb[0].mxu0
        %v1439 = vadd.f32 0.0, %v1438
        %v1440 = vpop.f32.mrb[0].mxu0
        %v1441 = vadd.f32 0.0, %v1440
        %1442 = vdwg.mxu0
        %v1445 = vcombine.low %v1439, %v1441
        %v1447 = vunpack.c.l.s4 1966171168
        %v1448 = vunpack.c.0.s8 %v1447
        %v1449 = vlaneseq
        %v1450 = vshrl.u32 %v1449, 7
        %v1451 = vsub.s32 %v1448, %v1450
        %v1452 = vrot.slane %v1445, %v1451
        %v1454 = vunpack.c.l.s4 1966171168
        %v1455 = vunpack.c.0.s8 %v1454
        %v1456 = vlaneseq
        %v1457 = vshrl.u32 %v1456, 7
        %v1458 = vsub.s32 %v1455, %v1457
        %v1459 = vrot.slane %v1452, %v1458
        %v1461 = vadd.f32 %v1371, %v1459
        %v1462 = vxor.u32 %v1461, 2147483648
        %v1463 = vmul.f32 %v1462, 1.442695
        %v1464 = vpow.pop %v1463
        %v1465 = vadd.f32 %v1464, 1.0
        %v1466 = vrcp.pop %v1465
        %v1467 = vmul.f32 1.0, %v1466
        %v1469 = vrot.slane %v1371, 2
        %v1471 = vtanh.pop %v1469
        %v1472 = vmul.f32 %v1369, %v1467
        %v1474 = vrot.slane %v1467, 1
        %v1476 = vmul.f32 %v1474, %v1471
        %v1477 = vadd.f32 %v1472, %v1476
        %1478 = vst [vmem:[#allocation2] sm:$0x1] %v1477
        %p1479 = scmp.eq.s32.totalorder %s25, 1
        // Predicated region
        $region77: #{_run.1} parent=51 // pred_check
          %p1480 = pneg %p1479
        $region78: #{_run.1} parent=51 // pred_check_branch
          %1482 = sbr.rel (%p1480) target = $region80
        $region79: #{_run.1} parent=51 // pred_region
          %v1483 = vld [vmem:[#allocation2] sm:$0x1]
          %v1484 = vld [vmem:[#allocation10] sm:$0xff]
          %v1485 = vld [vmem:[#allocation10 + $0x8] sm:$0xff]
          %v1486 = vld [vmem:[#allocation10 + $0x10] sm:$0xff]
          %v1487 = vld [vmem:[#allocation10 + $0x18] sm:$0xff]
          %v1488 = vld [vmem:[#allocation10 + $0x20] sm:$0xff]
          %v1489 = vld [vmem:[#allocation10 + $0x28] sm:$0xff]
          %v1490 = vld [vmem:[#allocation10 + $0x30] sm:$0xff]
          %v1491 = vld [vmem:[#allocation10 + $0x38] sm:$0xff]
          %v1492 = vld [vmem:[#allocation10 + $0x40] sm:$0xff]
          %v1493 = vld [vmem:[#allocation10 + $0x48] sm:$0xff]
          %v1494 = vld [vmem:[#allocation10 + $0x50] sm:$0xff]
          %v1495 = vld [vmem:[#allocation10 + $0x58] sm:$0xff]
          %v1496 = vld [vmem:[#allocation10 + $0x60] sm:$0xff]
          %v1497 = vld [vmem:[#allocation10 + $0x68] sm:$0xff]
          %v1498 = vld [vmem:[#allocation10 + $0x70] sm:$0xff]
          %v1499 = vld [vmem:[#allocation10 + $0x78] sm:$0xff]
          %v1500 = vld [vmem:[%s5] sm:$0x1]
          %1501 = vmatprep.subr.mxu0 0.0
          %1502 = vmatpush1.msra.mxu0 %v1484
          %1503 = vmatprep.subr.mxu0 0.0
          %1504 = vmatpush1.msra.mxu0 %v1485
          %1505 = vmatprep.subr.mxu0 0.0
          %1506 = vmatpush1.msra.mxu0 %v1486
          %1507 = vmatprep.subr.mxu0 0.0
          %1508 = vmatpush1.msra.mxu0 %v1487
          %1509 = vmatprep.subr.mxu0 0.0
          %1510 = vmatpush1.msra.mxu0 %v1488
          %1511 = vmatprep.subr.mxu0 0.0
          %1512 = vmatpush1.msra.mxu0 %v1489
          %1513 = vmatprep.subr.mxu0 0.0
          %1514 = vmatpush1.msra.mxu0 %v1490
          %1515 = vmatprep.subr.mxu0 0.0
          %1516 = vmatpush1.msra.mxu0 %v1491
          %1517 = vmatprep.subr.mxu0 0.0
          %1518 = vmatpush1.msra.mxu0 %v1492
          %1519 = vmatprep.subr.mxu0 0.0
          %1520 = vmatpush1.msra.mxu0 %v1493
          %1521 = vmatprep.subr.mxu0 0.0
          %1522 = vmatpush1.msra.mxu0 %v1494
          %1523 = vmatprep.subr.mxu0 0.0
          %1524 = vmatpush1.msra.mxu0 %v1495
          %1525 = vmatprep.subr.mxu0 0.0
          %1526 = vmatpush1.msra.mxu0 %v1496
          %1527 = vmatprep.subr.mxu0 0.0
          %1528 = vmatpush1.msra.mxu0 %v1497
          %1529 = vmatprep.subr.mxu0 0.0
          %1530 = vmatpush1.msra.mxu0 %v1498
          %1531 = vmatprep.subr.mxu0 0.0
          %1532 = vmatpush1.msra.mxu0 %v1499
          %1533 = vmatprep.subr.mxu0 0.0
          %1534 = vmatpush1.msra.mxu0 0.0
          %1535 = vmatprep.subr.mxu0 0.0
          %1536 = vmatpush1.msra.mxu0 0.0
          %1537 = vmatprep.subr.mxu0 0.0
          %1538 = vmatpush1.msra.mxu0 0.0
          %1539 = vmatprep.subr.mxu0 0.0
          %1540 = vmatpush1.msra.mxu0 0.0
          %1541 = vmatprep.subr.mxu0 0.0
          %1542 = vmatpush1.msra.mxu0 0.0
          %1543 = vmatprep.subr.mxu0 0.0
          %1544 = vmatpush1.msra.mxu0 0.0
          %1545 = vmatprep.subr.mxu0 0.0
          %1546 = vmatpush1.msra.mxu0 0.0
          %1547 = vmatprep.subr.mxu0 0.0
          %1548 = vmatpush1.msra.mxu0 0.0
          %1549 = vmatprep.subr.mxu0 0.0
          %1550 = vmatpush1.msra.mxu0 0.0
          %1551 = vmatprep.subr.mxu0 0.0
          %1552 = vmatpush1.msra.mxu0 0.0
          %1553 = vmatprep.subr.mxu0 0.0
          %1554 = vmatpush1.msra.mxu0 0.0
          %1555 = vmatprep.subr.mxu0 0.0
          %1556 = vmatpush1.msra.mxu0 0.0
          %1557 = vmatprep.subr.mxu0 0.0
          %1558 = vmatpush1.msra.mxu0 0.0
          %1559 = vmatprep.subr.mxu0 0.0
          %1560 = vmatpush1.msra.mxu0 0.0
          %1561 = vmatprep.subr.mxu0 0.0
          %1562 = vmatpush1.msra.mxu0 0.0
          %1563 = vmatprep.subr.mxu0 0.0
          %1564 = vmatpush1.msra.mxu0 0.0
          %1565 = vmatprep.mubr.f32.mxu0 0.0
          %1566 = vmatmul.mubr.f32.gmra.mrb[0].mxu0 %v1483
          %v1567 = vpop.f32.mrb[0].mxu0
          %v1568 = vadd.f32 %v1500, %v1567
          %v1569 = vpop.f32.mrb[0].mxu0
          %1570 = vdwg.mxu0
          %v1571 = vmax.f32 %v1568, 0.0
          %v1572 = vld [vmem:[#allocation12] sm:$0xff]
          %v1573 = vld [vmem:[#allocation12 + $0x8] sm:$0xff]
          %v1574 = vld [vmem:[#allocation12 + $0x10] sm:$0xff]
          %v1575 = vld [vmem:[#allocation12 + $0x18] sm:$0xff]
          %v1576 = vld [vmem:[#allocation12 + $0x20] sm:$0xff]
          %v1577 = vld [vmem:[#allocation12 + $0x28] sm:$0xff]
          %v1578 = vld [vmem:[#allocation12 + $0x30] sm:$0xff]
          %v1579 = vld [vmem:[#allocation12 + $0x38] sm:$0xff]
          %v1580 = vld [vmem:[#allocation12 + $0x40] sm:$0xff]
          %v1581 = vld [vmem:[#allocation12 + $0x48] sm:$0xff]
          %v1582 = vld [vmem:[#allocation12 + $0x50] sm:$0xff]
          %v1583 = vld [vmem:[#allocation12 + $0x58] sm:$0xff]
          %v1584 = vld [vmem:[#allocation12 + $0x60] sm:$0xff]
          %v1585 = vld [vmem:[#allocation12 + $0x68] sm:$0xff]
          %v1586 = vld [vmem:[#allocation12 + $0x70] sm:$0xff]
          %v1587 = vld [vmem:[#allocation12 + $0x78] sm:$0xff]
          %v1588 = vld [vmem:[%s7] sm:$0x1]
          %1589 = vmatprep.subr.mxu0 0.0
          %1590 = vmatpush1.msra.mxu0 %v1572
          %1591 = vmatprep.subr.mxu0 0.0
          %1592 = vmatpush1.msra.mxu0 %v1573
          %1593 = vmatprep.subr.mxu0 0.0
          %1594 = vmatpush1.msra.mxu0 %v1574
          %1595 = vmatprep.subr.mxu0 0.0
          %1596 = vmatpush1.msra.mxu0 %v1575
          %1597 = vmatprep.subr.mxu0 0.0
          %1598 = vmatpush1.msra.mxu0 %v1576
          %1599 = vmatprep.subr.mxu0 0.0
          %1600 = vmatpush1.msra.mxu0 %v1577
          %1601 = vmatprep.subr.mxu0 0.0
          %1602 = vmatpush1.msra.mxu0 %v1578
          %1603 = vmatprep.subr.mxu0 0.0
          %1604 = vmatpush1.msra.mxu0 %v1579
          %1605 = vmatprep.subr.mxu0 0.0
          %1606 = vmatpush1.msra.mxu0 %v1580
          %1607 = vmatprep.subr.mxu0 0.0
          %1608 = vmatpush1.msra.mxu0 %v1581
          %1609 = vmatprep.subr.mxu0 0.0
          %1610 = vmatpush1.msra.mxu0 %v1582
          %1611 = vmatprep.subr.mxu0 0.0
          %1612 = vmatpush1.msra.mxu0 %v1583
          %1613 = vmatprep.subr.mxu0 0.0
          %1614 = vmatpush1.msra.mxu0 %v1584
          %1615 = vmatprep.subr.mxu0 0.0
          %1616 = vmatpush1.msra.mxu0 %v1585
          %1617 = vmatprep.subr.mxu0 0.0
          %1618 = vmatpush1.msra.mxu0 %v1586
          %1619 = vmatprep.subr.mxu0 0.0
          %1620 = vmatpush1.msra.mxu0 %v1587
          %1621 = vmatprep.subr.mxu0 0.0
          %1622 = vmatpush1.msra.mxu0 0.0
          %1623 = vmatprep.subr.mxu0 0.0
          %1624 = vmatpush1.msra.mxu0 0.0
          %1625 = vmatprep.subr.mxu0 0.0
          %1626 = vmatpush1.msra.mxu0 0.0
          %1627 = vmatprep.subr.mxu0 0.0
          %1628 = vmatpush1.msra.mxu0 0.0
          %1629 = vmatprep.subr.mxu0 0.0
          %1630 = vmatpush1.msra.mxu0 0.0
          %1631 = vmatprep.subr.mxu0 0.0
          %1632 = vmatpush1.msra.mxu0 0.0
          %1633 = vmatprep.subr.mxu0 0.0
          %1634 = vmatpush1.msra.mxu0 0.0
          %1635 = vmatprep.subr.mxu0 0.0
          %1636 = vmatpush1.msra.mxu0 0.0
          %1637 = vmatprep.subr.mxu0 0.0
          %1638 = vmatpush1.msra.mxu0 0.0
          %1639 = vmatprep.subr.mxu0 0.0
          %1640 = vmatpush1.msra.mxu0 0.0
          %1641 = vmatprep.subr.mxu0 0.0
          %1642 = vmatpush1.msra.mxu0 0.0
          %1643 = vmatprep.subr.mxu0 0.0
          %1644 = vmatpush1.msra.mxu0 0.0
          %1645 = vmatprep.subr.mxu0 0.0
          %1646 = vmatpush1.msra.mxu0 0.0
          %1647 = vmatprep.subr.mxu0 0.0
          %1648 = vmatpush1.msra.mxu0 0.0
          %1649 = vmatprep.subr.mxu0 0.0
          %1650 = vmatpush1.msra.mxu0 0.0
          %1651 = vmatprep.subr.mxu0 0.0
          %1652 = vmatpush1.msra.mxu0 0.0
          %1653 = vmatprep.mubr.f32.mxu0 0.0
          %1654 = vmatmul.mubr.f32.gmra.mrb[0].mxu0 %v1571
          %v1655 = vpop.f32.mrb[0].mxu0
          %v1656 = vadd.f32 %v1588, %v1655
          %v1657 = vpop.f32.mrb[0].mxu0
          %1658 = vdwg.mxu0
          %v1659 = vmax.f32 %v1656, 0.0
          %vm1660 = vcmask 1040384
          %v1661 = vsel %vm1660, %v1659, -inf
          %1662 = vmax.xlane.f32.xlu0 %v1661
          %v1663 = vpop.xlane.xlu0 %1662
          %v1664 = vsub.f32 %v1659, %v1663
          %v1665 = vmul.f32 %v1664, 1.442695
          %v1666 = vpow.pop %v1665
          %v1667 = vsel %vm1660, %v1666, 0.0
          %1668 = vadd.xlane.f32.xlu0 %v1667
          %v1669 = vpop.xlane.xlu0 %1668
          %v1670 = vlog2.pop %v1669
          %v1671 = vmul.f32 %v1670, 0.6931472
          %v1672 = vsub.f32 %v1664, %v1671
          %1673 = vst [vmem:[#allocation13] sm:$0x1] %v1672
        $region80: #{_run.1} parent=51 // pred_fallthru
          _
        // Predicated region
        $region81: #{_run.1} parent=51 // pred_check
          %p1674 = pneg %p211
        $region82: #{_run.1} parent=51 // pred_check_branch
          %1676 = sbr.rel (%p1674) target = $region84
        $region83: #{_run.1} parent=51 // pred_region
          %s1678 = ssub.s32 16, 16
          %1679 = vsyncadd [#allocation6], %s1678
          %s1681 = sshll.u32 [#allocation13], 4
          %s1682 = int_to_ptr.vmem [resolvable:$true] %s1681
          %1684 = dma.vmem_to_hbm [thread:$0]  %s1682, 16, %s8, [#allocation6]
        $region84: #{_run.1} parent=51 // pred_fallthru
          _
        // Predicated region
        $region85: #{_run.1} parent=51 // pred_check
          %p1685 = pneg %p211
        $region86: #{_run.1} parent=51 // pred_check_branch
          %1687 = sbr.rel (%p1685) target = $region88
        $region87: #{_run.1} parent=51 // pred_region
          %1688 = dma.done [#allocation6], 16
        $region88: #{_run.1} parent=51 // pred_fallthru
          _
      $region52: #{_run.1} parent=5 // pred_fallthru
        _
      %p1689 = scmp.le.s32.totalorder 2, %s20
      // Predicated region
      $region89: #{_run.1} parent=5 // pred_check
        %p1690 = pneg %p1689
      $region90: #{_run.1} parent=5 // pred_check_branch
        %1692 = sbr.rel (%p1690) target = $region92
      $region91: #{_run.1} parent=5 // pred_region
        %s1693 = ssub.s32 %s20, 2
      $region92: #{_run.1} parent=5 // pred_fallthru
        _
    $region6: #{_run.1} parent=1 // loop_footer
      %s24 = sadd.s32 1, %s20
    $region7: #{_run.1} parent=1 // loop_footer_branch
      %19 = sbr.rel target = $region3
    $region8: #{_run.1} parent=1 // loop_exit
      _
    %1694 = vsyncpa [#allocation5], 1
    %s1695 = scalar_lea.sflag [#allocation5], 1
    %1696 = vsyncpa %s1695, 1
    %1697 = vsyncpa [#allocation8], 1
    %1698 = vsyncpa [#allocation11], 1
    %1699 = vsyncpa [#allocation6], 1
    %s1700 = scalar_lea.sflag [#allocation6], 1
    %1701 = vsyncpa %s1700, 1

</llo_original>
